<compile_context>
chip_gen: v6e
topology: v6e:2x2x1
jax: 0.10.0
libtpu: 0.0.40
codegen_flags: <defaults>
</compile_context>

<pallas_src>
import functools

import jax
import jax.numpy as jnp
import numpy as np
from jax.experimental import pallas as pl
from jax.experimental.pallas import tpu as pltpu

EMB_DIM = 16       # embedding_size
CONV_OUT = 64      # conv_out_channel
KW = 5             # Conv1d kernel size
PAD = 2            # Conv1d padding
TB_MAX = 128       # max examples per grid step


def _round_up(n, m):
    return ((n + m - 1) // m) * m


def _encode_kernel(ids_ref, fused_ref, convb_ref, out_ref, *, seq_len):
    ntile = ids_ref.shape[0]            # TB * stride_pad token rows
    tb = out_ref.shape[0]               # TB examples
    stride_pad = ntile // tb            # sublane-aligned per-example length
    c_pad = fused_ref.shape[0]          # padded char_dim (K of the fused matmul)

    # Embedding lookup fused with the Conv1d contraction: one-hot(id) @ fused.
    # Padding rows carry id == -1, so their one-hot row is all-zero, which is
    # exactly the Conv1d zero padding.
    ids = ids_ref[...]                                                 # (ntile, 1)
    lanes = jax.lax.broadcasted_iota(jnp.int32, (ntile, c_pad), 1)
    onehot = (lanes == ids).astype(jnp.bfloat16)                       # (ntile, C_pad)
    big = jnp.dot(onehot, fused_ref[...],
                  preferred_element_type=jnp.float32)                  # (ntile, KW*64)

    # conv[row, :] = sum_k big[row + k, k*64:(k+1)*64]
    # (roll wrap-around rows only land on positions the pool masks out).
    acc = big[:, 0:CONV_OUT]
    for k in range(1, KW):
        blk = big[:, k * CONV_OUT:(k + 1) * CONV_OUT]
        acc = acc + pltpu.roll(blk, ntile - k, axis=0)   # == big[row + k, blk_k]

    # AdaptiveMaxPool1d(1): mask non-valid conv rows (positions >= L) to -inf,
    # then a single vectorized reduction; bias is added after the pool.
    acc3 = acc.reshape(tb, stride_pad, CONV_OUT)
    pos = jax.lax.broadcasted_iota(jnp.int32, acc3.shape, 1)
    acc3 = jnp.where(pos < seq_len, acc3, -jnp.inf)
    pooled = jnp.max(acc3, axis=1) + convb_ref[...]                    # (TB, 64)
    out_ref[...] = pooled                                              # one dense store


def prepare_params(params):
    """One-time weight prep: fold embedding into conv weights (f32), cast bf16."""
    table = params["embedding"].astype(jnp.float32)        # (C, 16)
    conv_w = params["conv_w"].astype(jnp.float32)          # (64, 16, 5)
    C = table.shape[0]
    c_pad = _round_up(C, 128)                              # (pad toward 256 is also fine)
    # fused[:, k*64:(k+1)*64] = table @ W_k, W_k = conv_w[:, :, k].T -> (16, 64)
    fused = jnp.concatenate([table @ conv_w[:, :, k].T for k in range(KW)],
                            axis=1)                        # (C, KW*64) f32
    fused = jnp.pad(fused, ((0, c_pad - C), (0, 0)))       # zero rows: harmless w/ one-hot
    return {
        "fused": fused.astype(jnp.bfloat16),                                   # (C_pad, 320)
        "conv_b": params["conv_b"].reshape(1, CONV_OUT).astype(jnp.float32),   # (1, 64)
    }


def _choose_batch_tiling(B, stride_pad, c_pad):
    """Large batch tile, VMEM-capped, keeping >=2 grid steps when possible (v7x)."""
    # Per-row VMEM of the big intermediates (one-hot bf16 + fused matmul f32 + acc).
    bytes_per_row = 2 * c_pad + 4 * (KW + 1) * CONV_OUT
    row_cap = max(8 * stride_pad, (16 << 20) // bytes_per_row)
    tb_cap = max(8, (row_cap // stride_pad) // 8 * 8)
    tb_max = min(TB_MAX, tb_cap)

    b8 = _round_up(max(B, 1), 8)
    if b8 <= 8:
        tb = min(8, tb_max)
    elif b8 <= 2 * tb_max:
        tb = min(tb_max, _round_up(b8, 16) // 2)   # exactly 2 tiles -> both v7x TCs
    else:
        tb = tb_max
    b_pad = _round_up(B, tb)
    return tb, b_pad


def encode_forward(prep, x):
    """x: (B, L) int token ids. Returns (1, B, 64), matching x.view(1, -1, 64)."""
    B, L = x.shape
    stride = L + 2 * PAD
    stride_pad = _round_up(stride, 8)            # sublane-aligned per-example rows
    fused, conv_b = prep["fused"], prep["conv_b"]
    tb, b_pad = _choose_batch_tiling(B, stride_pad, fused.shape[0])
    n_tiles = b_pad // tb
    ntile = tb * stride_pad

    # Pad batch to b_pad examples and each example to stride_pad rows; all
    # padding rows get id = -1 (zero one-hot row == Conv1d zero padding; the
    # alignment rows are masked out of the pool in-kernel).
    ids = jnp.pad(x.astype(jnp.int32),
                  ((0, b_pad - B), (PAD, stride_pad - stride + PAD)),
                  constant_values=-1)                               # (b_pad, stride_pad)
    ids_flat = ids.reshape(b_pad * stride_pad, 1)

    kernel = functools.partial(_encode_kernel, seq_len=L)
    out = pl.pallas_call(
        kernel,
        out_shape=jax.ShapeDtypeStruct((b_pad, CONV_OUT), jnp.float32),
        grid=(n_tiles,),
        in_specs=[
            pl.BlockSpec((ntile, 1), lambda i: (i, 0)),       # per-tile token ids
            pl.BlockSpec(fused.shape, lambda i: (0, 0)),      # fused weights: resident
            pl.BlockSpec(conv_b.shape, lambda i: (0, 0)),     # bias: resident
        ],
        out_specs=pl.BlockSpec((tb, CONV_OUT), lambda i: (i, 0)),
        compiler_params=pltpu.CompilerParams(
            dimension_semantics=("parallel",)),               # both v7x TCs
    )(ids_flat, fused, conv_b)

    return out[:B].reshape(1, B, CONV_OUT)


encode_forward = jax.jit(encode_forward)


def init_params(key, char_dim):
    k0, k1, k2 = jax.random.split(key, 3)
    bound = 1.0 / np.sqrt(EMB_DIM * KW)
    return {
        "embedding": jax.random.normal(k0, (char_dim, EMB_DIM), jnp.float32),
        "conv_w": jax.random.uniform(k1, (CONV_OUT, EMB_DIM, KW), jnp.float32,
                                     -bound, bound),
        "conv_b": jax.random.uniform(k2, (CONV_OUT,), jnp.float32,
                                     -bound, bound),
    }


def reference_forward(params, x):
    """Pure-JAX f32 reference reproducing the PyTorch semantics."""
    emb = params["embedding"][x]                              # (B, L, 16)
    B, L, _ = emb.shape
    emb_pad = jnp.pad(emb, ((0, 0), (PAD, PAD), (0, 0)))
    w, b = params["conv_w"], params["conv_b"]
    conv = jnp.zeros((B, L, CONV_OUT), jnp.float32)
    for k in range(KW):
        conv = conv + jnp.einsum("ble,oe->blo",
                                 emb_pad[:, k:k + L, :], w[:, :, k])
    conv = conv + b
    pooled = jnp.max(conv, axis=1)                            # (B, 64)
    return pooled.reshape(1, B, CONV_OUT)                     # view(1, -1, 64)


if __name__ == "__main__":
    char_dim = 128
    B, L = 32, 16
    key = jax.random.PRNGKey(0)
    kp, kx = jax.random.split(key)
    params = init_params(kp, char_dim)
    prep = prepare_params(params)     # one-time weight layout / fusion prep
    x = jax.random.randint(kx, (B, L), 0, char_dim, dtype=jnp.int32)

    out = encode_forward(prep, x)
    out = jax.block_until_ready(out)

    ref = reference_forward(params, x)
    assert out.shape == (1, B, CONV_OUT)
    assert bool(jnp.all(jnp.isfinite(out)))
    np.testing.assert_allclose(np.asarray(out), np.asarray(ref),
                               rtol=2e-2, atol=2e-2)
    print("KERNEL_OK")
</pallas_src>

<mosaic_0001>
module attributes {stable_mosaic.version = 11 : i64} {
  func.func @_encode_kernel(%arg0: i32, %arg1: memref<384x1xi32, #tpu.memory_space<vmem>>, %arg2: memref<128x320xbf16, #tpu.memory_space<vmem>>, %arg3: memref<1x64xf32, #tpu.memory_space<vmem>>, %arg4: memref<16x64xf32, #tpu.memory_space<vmem>>) attributes {dimension_semantics = [#tpu.dimension_semantics<parallel>], iteration_bounds = array<i64: 2>, scalar_prefetch = 0 : i64, scratch_operands = 0 : i64, tpu.core_type = #tpu.core_type<tc>, window_params = [{transform_indices = @transform_0, window_bounds = array<i64: 384, 1>}, {pipeline_mode = #tpu.pipeline_mode<synchronous>, transform_indices = @transform_1, window_bounds = array<i64: 128, 320>}, {pipeline_mode = #tpu.pipeline_mode<synchronous>, transform_indices = @transform_2, window_bounds = array<i64: 1, 64>}, {transform_indices = @transform_3, window_bounds = array<i64: 16, 64>}]} {
    %c0 = arith.constant 0 : index
    %c0_0 = arith.constant 0 : index
    %0 = vector.load %arg1[%c0, %c0_0] : memref<384x1xi32, #tpu.memory_space<vmem>>, vector<384x1xi32>
    %1 = tpu.iota {dimensions = array<i32: 1>} : vector<384x128xi32>
    %2 = vector.broadcast %0 : vector<384x1xi32> to vector<384x128xi32>
    %3 = arith.cmpi eq, %1, %2 : vector<384x128xi32>
    %4 = arith.extui %3 : vector<384x128xi1> to vector<384x128xi32>
    %5 = arith.sitofp %4 : vector<384x128xi32> to vector<384x128xf32>
    %6 = arith.truncf %5 : vector<384x128xf32> to vector<384x128xbf16>
    %c0_1 = arith.constant 0 : index
    %c0_2 = arith.constant 0 : index
    %7 = vector.load %arg2[%c0_1, %c0_2] : memref<128x320xbf16, #tpu.memory_space<vmem>>, vector<128x320xbf16>
    %cst = arith.constant dense<0.000000e+00> : vector<384x320xf32>
    %8 = tpu.matmul %6, %7, %cst {dimension_numbers = #tpu.dot_dimension_numbers<[1], [0], [0], [1], [0, 0, 1, 1], [], []>} : vector<384x128xbf16>, vector<128x320xbf16>, vector<384x320xf32> -> vector<384x320xf32>
    %9 = vector.extract_strided_slice %8 {offsets = [0, 0], sizes = [384, 64], strides = [1, 1]} : vector<384x320xf32> to vector<384x64xf32>
    %10 = vector.extract_strided_slice %8 {offsets = [0, 64], sizes = [384, 64], strides = [1, 1]} : vector<384x320xf32> to vector<384x64xf32>
    %c383_i32 = arith.constant 383 : i32
    %11 = tpu.dynamic_rotate %10 by %c383_i32 dim 0 : vector<384x64xf32>, i32 -> vector<384x64xf32>
    %12 = arith.addf %9, %11 : vector<384x64xf32>
    %13 = vector.extract_strided_slice %8 {offsets = [0, 128], sizes = [384, 64], strides = [1, 1]} : vector<384x320xf32> to vector<384x64xf32>
    %c382_i32 = arith.constant 382 : i32
    %14 = tpu.dynamic_rotate %13 by %c382_i32 dim 0 : vector<384x64xf32>, i32 -> vector<384x64xf32>
    %15 = arith.addf %12, %14 : vector<384x64xf32>
    %16 = vector.extract_strided_slice %8 {offsets = [0, 192], sizes = [384, 64], strides = [1, 1]} : vector<384x320xf32> to vector<384x64xf32>
    %c381_i32 = arith.constant 381 : i32
    %17 = tpu.dynamic_rotate %16 by %c381_i32 dim 0 : vector<384x64xf32>, i32 -> vector<384x64xf32>
    %18 = arith.addf %15, %17 : vector<384x64xf32>
    %19 = vector.extract_strided_slice %8 {offsets = [0, 256], sizes = [384, 64], strides = [1, 1]} : vector<384x320xf32> to vector<384x64xf32>
    %c380_i32 = arith.constant 380 : i32
    %20 = tpu.dynamic_rotate %19 by %c380_i32 dim 0 : vector<384x64xf32>, i32 -> vector<384x64xf32>
    %21 = arith.addf %18, %20 : vector<384x64xf32>
    %22 = vector.shape_cast %21 : vector<384x64xf32> to vector<16x24x64xf32>
    %23 = tpu.iota {dimensions = array<i32: 1>} : vector<16x24x64xi32>
    %c16_i32 = arith.constant 16 : i32
    %24 = vector.broadcast %c16_i32 : i32 to vector<16x24x64xi32>
    %25 = arith.cmpi slt, %23, %24 : vector<16x24x64xi32>
    %cst_3 = arith.constant 0xFF800000 : f32
    %26 = vector.broadcast %cst_3 : f32 to vector<16x24x64xf32>
    %27 = arith.select %25, %22, %26 : vector<16x24x64xi1>, vector<16x24x64xf32>
    %cst_4 = arith.constant dense<0xFF800000> : vector<16x64xf32>
    %28 = vector.multi_reduction <maximumf>, %27, %cst_4 [1] : vector<16x24x64xf32> to vector<16x64xf32>
    %c0_5 = arith.constant 0 : index
    %c0_6 = arith.constant 0 : index
    %29 = vector.load %arg3[%c0_5, %c0_6] : memref<1x64xf32, #tpu.memory_space<vmem>>, vector<1x64xf32>
    %30 = vector.broadcast %29 : vector<1x64xf32> to vector<16x64xf32>
    %31 = arith.addf %28, %30 : vector<16x64xf32>
    %c0_7 = arith.constant 0 : index
    %c0_8 = arith.constant 0 : index
    %32 = vector.load %arg4[%c0_7, %c0_8] : memref<16x64xf32, #tpu.memory_space<vmem>>, vector<16x64xf32>
    tpu.vector_store %arg4[%c0_7, %c0_8], %31 {strides = array<i32>} : memref<16x64xf32, #tpu.memory_space<vmem>>, vector<16x64xf32>,
    return
  }
  func.func @transform_0(%arg0: i32) -> (i32, i32) {
    %c0_i32 = arith.constant 0 : i32
    %c0_i32_0 = arith.constant 0 : i32
    return %arg0, %c0_i32 : i32, i32
  }
  func.func @transform_1(%arg0: i32) -> (i32, i32) {
    %c0_i32 = arith.constant 0 : i32
    %c0_i32_0 = arith.constant 0 : i32
    %c0_i32_1 = arith.constant 0 : i32
    return %c0_i32, %c0_i32_0 : i32, i32
  }
  func.func @transform_2(%arg0: i32) -> (i32, i32) {
    %c0_i32 = arith.constant 0 : i32
    %c0_i32_0 = arith.constant 0 : i32
    %c0_i32_1 = arith.constant 0 : i32
    return %c0_i32, %c0_i32_0 : i32, i32
  }
  func.func @transform_3(%arg0: i32) -> (i32, i32) {
    %c0_i32 = arith.constant 0 : i32
    %c0_i32_0 = arith.constant 0 : i32
    return %arg0, %c0_i32 : i32, i32
  }
}

</mosaic_0001>

<llo_original>
// kernel: encode_forward.1
$region0: #{encode_forward.1}
  #allocation0 [shape = 'u32[]', space=smem, size = 0x4, offset = 0x4, fixed_abs, tag = 'smem constant byte address 0x4 - core index']
  #allocation1 [shape = 'u32[144,128]{1,0:T(1,128)}', space=vmem, size = 0x12000, scoped, tag = 'internal scratch']
  %s0 = inlined_call_operand.vmem [shape: s32[768,1], index: 0, kind: input, shape index: {}]
  %s1 = inlined_call_operand.vmem [shape: bf16[128,320], index: 1, kind: input, shape index: {}]
  %s2 = inlined_call_operand.vmem [shape: f32[1,64], index: 2, kind: input, shape index: {}]
  %s3 = inlined_call_operand.hbm [shape: f32[32,64], index: 3, kind: output, shape index: {}]
  %s4 = sld [smem:[#allocation0]]
  $region45: #{encode_forward.1} parent=0
    _
  %s6 = ssub.s32 1, %s4
  %s7 = scalar_select 0, %s6, %s4
  $region1: #{encode_forward.1} parent=0
    #allocation2 [shape = 'u8[16384]{0}', space=vmem, size = 0x4000, scoped, tag = 'output window, operand 0']
    #allocation3 [shape = 's32[2]{0}', space=sflag, size = 0x8, scoped, tag = 'scoped memory for encode_forward.1']
    %8 = vsyncpa [#allocation3], 0
    %s9 = scalar_lea.sflag [#allocation3], 1
    %10 = vsyncpa %s9, 0
    loop: start=0, step=1, limit=4
    $region2: #{encode_forward.1} parent=1 // loop_pre_header
      _
    $region3: #{encode_forward.1} parent=1 // loop_header
      %s12 = sphi 0, %s16
      %p13 = scmp.ge.s32.totalorder %s12, 4
      %s22 = sphi 0, %s24
      %s25 = sphi 0, %s22
      %s26 = sphi 0, %s25
      %s42 = sphi 0, %s26
      %s46 = sphi 0, %s46
      %s48 = sphi 0, %s46
      %s49 = sphi 0, %s48
      %s63 = sphi 0, %s49
      %s67 = sphi 0, %s67
      %s69 = sphi 0, %s67
      %s70 = sphi 0, %s69
      %s84 = sphi 0, %s70
      %s90 = sphi 0, %s92
      %s93 = sphi 0, %s90
      %s94 = sphi 0, %s93
      %s110 = sphi 0, %s94
    $region4: #{encode_forward.1} parent=1 // loop_header_branch
      %15 = sbr.rel (%p13) target = $region8
    $region5: #{encode_forward.1} parent=1 // loop_body
      %s17 = ssub.s32 %s12, 1
      %s18 = ssub.s32 %s12, 2
      %s19 = sadd.s32 %s12, 1
      %s20 = ssub.s32 %s12, %s19
      %p21 = scmp.eq.s32.totalorder %s20, 0
      %s23 = sadd.s32 %s22, 1
      %s24 = scalar_select %p21, %s22, %s23
      %p27 = pneg %p21
      %p28 = scmp.eq.s32.totalorder %s12, 1
      %p29 = por %p27, %p28
      %p30 = scmp.ne.s32.totalorder %s22, %s25
      %p31 = scmp.eq.s32.totalorder %s12, 0
      %p32 = por %p30, %p31
      %p33 = scmp.ne.s32.totalorder %s22, %s25
      %p34 = scmp.eq.s32.totalorder %s17, 1
      %p35 = por %p33, %p34
      %p36 = scmp.ne.s32.totalorder %s25, %s26
      %p37 = scmp.eq.s32.totalorder %s17, 0
      %p38 = por %p36, %p37
      %p39 = scmp.ne.s32.totalorder %s25, %s26
      %p40 = scmp.eq.s32.totalorder %s18, 1
      %p41 = por %p39, %p40
      %p43 = scmp.ne.s32.totalorder %s26, %s42
      %p44 = scmp.eq.s32.totalorder %s18, 0
      %p45 = por %p43, %p44
      %s47 = sadd.s32 %s46, 1
      %p50 = scmp.eq.s32.totalorder %s12, 1
      %p51 = scmp.ne.s32.totalorder %s46, %s48
      %p52 = scmp.eq.s32.totalorder %s12, 0
      %p53 = por %p51, %p52
      %p54 = scmp.ne.s32.totalorder %s46, %s48
      %p55 = scmp.eq.s32.totalorder %s17, 1
      %p56 = por %p54, %p55
      %p57 = scmp.ne.s32.totalorder %s48, %s49
      %p58 = scmp.eq.s32.totalorder %s17, 0
      %p59 = por %p57, %p58
      %p60 = scmp.ne.s32.totalorder %s48, %s49
      %p61 = scmp.eq.s32.totalorder %s18, 1
      %p62 = por %p60, %p61
      %p64 = scmp.ne.s32.totalorder %s49, %s63
      %p65 = scmp.eq.s32.totalorder %s18, 0
      %p66 = por %p64, %p65
      %s68 = sadd.s32 %s67, 1
      %p71 = scmp.eq.s32.totalorder %s12, 1
      %p72 = scmp.ne.s32.totalorder %s67, %s69
      %p73 = scmp.eq.s32.totalorder %s12, 0
      %p74 = por %p72, %p73
      %p75 = scmp.ne.s32.totalorder %s67, %s69
      %p76 = scmp.eq.s32.totalorder %s17, 1
      %p77 = por %p75, %p76
      %p78 = scmp.ne.s32.totalorder %s69, %s70
      %p79 = scmp.eq.s32.totalorder %s17, 0
      %p80 = por %p78, %p79
      %p81 = scmp.ne.s32.totalorder %s69, %s70
      %p82 = scmp.eq.s32.totalorder %s18, 1
      %p83 = por %p81, %p82
      %p85 = scmp.ne.s32.totalorder %s70, %s84
      %p86 = scmp.eq.s32.totalorder %s18, 0
      %p87 = por %p85, %p86
      %s88 = ssub.s32 %s12, %s19
      %p89 = scmp.eq.s32.totalorder %s88, 0
      %s91 = sadd.s32 %s90, 1
      %s92 = scalar_select %p89, %s90, %s91
      %p95 = pneg %p89
      %p96 = scmp.eq.s32.totalorder %s12, 1
      %p97 = por %p95, %p96
      %p98 = scmp.ne.s32.totalorder %s90, %s93
      %p99 = scmp.eq.s32.totalorder %s12, 0
      %p100 = por %p98, %p99
      %p101 = scmp.ne.s32.totalorder %s90, %s93
      %p102 = scmp.eq.s32.totalorder %s17, 1
      %p103 = por %p101, %p102
      %p104 = scmp.ne.s32.totalorder %s93, %s94
      %p105 = scmp.eq.s32.totalorder %s17, 0
      %p106 = por %p104, %p105
      %p107 = scmp.ne.s32.totalorder %s93, %s94
      %p108 = scmp.eq.s32.totalorder %s18, 1
      %p109 = por %p107, %p108
      %p111 = scmp.ne.s32.totalorder %s94, %s110
      %p112 = scmp.eq.s32.totalorder %s18, 0
      %p113 = por %p111, %p112
      %p114 = scmp.le.s32.totalorder 1, %s12
      %p115 = scmp.lt.s32.totalorder %s12, 3
      %p116 = pnand %p114, %p115
      %p117 = pneg %p116
      // Predicated region
      $region9: #{encode_forward.1} parent=5 // pred_check
        _
      $region10: #{encode_forward.1} parent=5 // pred_check_branch
        %119 = sbr.rel (%p116) target = $region12
      $region11: #{encode_forward.1} parent=5 // pred_region
        %s120 = ssub.s32 %s12, 1
        // Predicated region
        $region13: #{encode_forward.1} parent=11 // pred_check
          %p121 = pneg %p59
        $region14: #{encode_forward.1} parent=11 // pred_check_branch
          %123 = sbr.rel (%p121) target = $region16
        $region15: #{encode_forward.1} parent=11 // pred_region
          _
        $region16: #{encode_forward.1} parent=11 // pred_fallthru
          _
        // Predicated region
        $region17: #{encode_forward.1} parent=11 // pred_check
          %p124 = pneg %p80
        $region18: #{encode_forward.1} parent=11 // pred_check_branch
          %126 = sbr.rel (%p124) target = $region20
        $region19: #{encode_forward.1} parent=11 // pred_region
          _
        $region20: #{encode_forward.1} parent=11 // pred_fallthru
          _
      $region12: #{encode_forward.1} parent=5 // pred_fallthru
        _
      %p127 = scmp.lt.s32.totalorder %s12, 2
      // Predicated region
      $region21: #{encode_forward.1} parent=5 // pred_check
        %p128 = pneg %p127
      $region22: #{encode_forward.1} parent=5 // pred_check_branch
        %130 = sbr.rel (%p128) target = $region24
      $region23: #{encode_forward.1} parent=5 // pred_region
        // Predicated region
        $region25: #{encode_forward.1} parent=23 // pred_check
          %p131 = pneg %p32
        $region26: #{encode_forward.1} parent=23 // pred_check_branch
          %133 = sbr.rel (%p131) target = $region28
        $region27: #{encode_forward.1} parent=23 // pred_region
          %s134 = smul.u32 48, %s12
          %p135 = scmp.lt.s32.totalorder %s134, 95
          %s136 = scalar_select %p135, %s134, 95
          %s137 = smul.addr %s136, 8
          %s138 = scalar_lea.vmem %s0, %s137
          %s139 = smul.u32 48, %s12
        $region28: #{encode_forward.1} parent=23 // pred_fallthru
          _
      $region24: #{encode_forward.1} parent=5 // pred_fallthru
        _
      %p140 = scmp.le.s32.totalorder 1, %s12
      %p141 = scmp.lt.s32.totalorder %s12, 3
      %p142 = pnand %p140, %p141
      %p143 = pneg %p142
      // Predicated region
      $region29: #{encode_forward.1} parent=5 // pred_check
        _
      $region30: #{encode_forward.1} parent=5 // pred_check_branch
        %145 = sbr.rel (%p142) target = $region32
      $region31: #{encode_forward.1} parent=5 // pred_region
        %s146 = ssub.s32 %s12, 1
        %s147 = smul.u32 48, %s17
        %p148 = scmp.lt.s32.totalorder %s147, 95
        %s149 = scalar_select %p148, %s147, 95
        %s150 = smul.addr %s149, 8
        %s151 = scalar_lea.vmem %s0, %s150
        %p152 = pneg %p38
        %p153 = pneg %p35
        %p154 = pneg %p59
        %p155 = pneg %p56
        %p156 = pneg %p80
        %p157 = pneg %p77
        %p158 = pneg %p106
        %p159 = pneg %p103
        %s160 = sand.u32 %s93, 1
        %s161 = scalar_lea.sflag [#allocation3], %s160
        %s162 = sand.u32 %s93, 1
        %s163 = smul.addr %s162, 16
        %s164 = scalar_lea.vmem [#allocation2], %s163
        %s165 = smul.u32 48, %s17
        %p166 = scmp.lt.s32.totalorder %s165, 95
        %s167 = scalar_select %p166, %s165, 95
        %s168 = smul.addr %s167, 8
        %s169 = scalar_lea.vmem %s0, %s168
        %s170 = smul.u32 48, %s17
        %s171 = smul.u32 2, %s17
        %v173 = vld [vmem:[%s169] sm:$0xff]
        %v174 = vld [vmem:[%s169 + $0x8] sm:$0xff]
        %v175 = vld [vmem:[%s169 + $0x10] sm:$0xff]
        %v176 = vld [vmem:[%s169 + $0x18] sm:$0xff]
        %v177 = vld [vmem:[%s169 + $0x20] sm:$0xff]
        %v178 = vld [vmem:[%s169 + $0x28] sm:$0xff]
        %v179 = vld [vmem:[%s169 + $0x30] sm:$0xff]
        %v180 = vld [vmem:[%s169 + $0x38] sm:$0xff]
        %v181 = vld [vmem:[%s169 + $0x40] sm:$0xff]
        %v182 = vld [vmem:[%s169 + $0x48] sm:$0xff]
        %v183 = vld [vmem:[%s169 + $0x50] sm:$0xff]
        %v184 = vld [vmem:[%s169 + $0x58] sm:$0xff]
        %v185 = vld [vmem:[%s169 + $0x60] sm:$0xff]
        %v186 = vld [vmem:[%s169 + $0x68] sm:$0xff]
        %v187 = vld [vmem:[%s169 + $0x70] sm:$0xff]
        %v188 = vld [vmem:[%s169 + $0x78] sm:$0xff]
        %v189 = vld [vmem:[%s169 + $0x80] sm:$0xff]
        %v190 = vld [vmem:[%s169 + $0x88] sm:$0xff]
        %v191 = vld [vmem:[%s169 + $0x90] sm:$0xff]
        %v192 = vld [vmem:[%s169 + $0x98] sm:$0xff]
        %v193 = vld [vmem:[%s169 + $0xa0] sm:$0xff]
        %v194 = vld [vmem:[%s169 + $0xa8] sm:$0xff]
        %v195 = vld [vmem:[%s169 + $0xb0] sm:$0xff]
        %v196 = vld [vmem:[%s169 + $0xb8] sm:$0xff]
        %v197 = vld [vmem:[%s169 + $0xc0] sm:$0xff]
        %v198 = vld [vmem:[%s169 + $0xc8] sm:$0xff]
        %v199 = vld [vmem:[%s169 + $0xd0] sm:$0xff]
        %v200 = vld [vmem:[%s169 + $0xd8] sm:$0xff]
        %v201 = vld [vmem:[%s169 + $0xe0] sm:$0xff]
        %v202 = vld [vmem:[%s169 + $0xe8] sm:$0xff]
        %v203 = vld [vmem:[%s169 + $0xf0] sm:$0xff]
        %v204 = vld [vmem:[%s169 + $0xf8] sm:$0xff]
        %v205 = vld [vmem:[%s169 + $0x100] sm:$0xff]
        %v206 = vld [vmem:[%s169 + $0x108] sm:$0xff]
        %v207 = vld [vmem:[%s169 + $0x110] sm:$0xff]
        %v208 = vld [vmem:[%s169 + $0x118] sm:$0xff]
        %v209 = vld [vmem:[%s169 + $0x120] sm:$0xff]
        %v210 = vld [vmem:[%s169 + $0x128] sm:$0xff]
        %v211 = vld [vmem:[%s169 + $0x130] sm:$0xff]
        %v212 = vld [vmem:[%s169 + $0x138] sm:$0xff]
        %v213 = vld [vmem:[%s169 + $0x140] sm:$0xff]
        %v214 = vld [vmem:[%s169 + $0x148] sm:$0xff]
        %v215 = vld [vmem:[%s169 + $0x150] sm:$0xff]
        %v216 = vld [vmem:[%s169 + $0x158] sm:$0xff]
        %v217 = vld [vmem:[%s169 + $0x160] sm:$0xff]
        %v218 = vld [vmem:[%s169 + $0x168] sm:$0xff]
        %v219 = vld [vmem:[%s169 + $0x170] sm:$0xff]
        %v220 = vld [vmem:[%s169 + $0x178] sm:$0xff]
        %v221 = vlaneseq
        %v222 = vand.u32 %v221, 127
        %223 = vset.pattern.permute.xlu0 0
        %224 = vperm.xlu0 %223, %v173
        %v225 = vpop.permute.xlu0 %224
        %226 = vset.pattern.permute.xlu0 0
        %227 = vperm.xlu0 %226, %v174
        %v228 = vpop.permute.xlu0 %227
        %229 = vset.pattern.permute.xlu0 0
        %230 = vperm.xlu0 %229, %v175
        %v231 = vpop.permute.xlu0 %230
        %232 = vset.pattern.permute.xlu0 0
        %233 = vperm.xlu0 %232, %v176
        %v234 = vpop.permute.xlu0 %233
        %235 = vset.pattern.permute.xlu0 0
        %236 = vperm.xlu0 %235, %v177
        %v237 = vpop.permute.xlu0 %236
        %238 = vset.pattern.permute.xlu0 0
        %239 = vperm.xlu0 %238, %v178
        %v240 = vpop.permute.xlu0 %239
        %241 = vset.pattern.permute.xlu0 0
        %242 = vperm.xlu0 %241, %v179
        %v243 = vpop.permute.xlu0 %242
        %244 = vset.pattern.permute.xlu0 0
        %245 = vperm.xlu0 %244, %v180
        %v246 = vpop.permute.xlu0 %245
        %247 = vset.pattern.permute.xlu0 0
        %248 = vperm.xlu0 %247, %v181
        %v249 = vpop.permute.xlu0 %248
        %250 = vset.pattern.permute.xlu0 0
        %251 = vperm.xlu0 %250, %v182
        %v252 = vpop.permute.xlu0 %251
        %253 = vset.pattern.permute.xlu0 0
        %254 = vperm.xlu0 %253, %v183
        %v255 = vpop.permute.xlu0 %254
        %256 = vset.pattern.permute.xlu0 0
        %257 = vperm.xlu0 %256, %v184
        %v258 = vpop.permute.xlu0 %257
        %259 = vset.pattern.permute.xlu0 0
        %260 = vperm.xlu0 %259, %v185
        %v261 = vpop.permute.xlu0 %260
        %262 = vset.pattern.permute.xlu0 0
        %263 = vperm.xlu0 %262, %v186
        %v264 = vpop.permute.xlu0 %263
        %265 = vset.pattern.permute.xlu0 0
        %266 = vperm.xlu0 %265, %v187
        %v267 = vpop.permute.xlu0 %266
        %268 = vset.pattern.permute.xlu0 0
        %269 = vperm.xlu0 %268, %v188
        %v270 = vpop.permute.xlu0 %269
        %271 = vset.pattern.permute.xlu0 0
        %272 = vperm.xlu0 %271, %v189
        %v273 = vpop.permute.xlu0 %272
        %274 = vset.pattern.permute.xlu0 0
        %275 = vperm.xlu0 %274, %v190
        %v276 = vpop.permute.xlu0 %275
        %277 = vset.pattern.permute.xlu0 0
        %278 = vperm.xlu0 %277, %v191
        %v279 = vpop.permute.xlu0 %278
        %280 = vset.pattern.permute.xlu0 0
        %281 = vperm.xlu0 %280, %v192
        %v282 = vpop.permute.xlu0 %281
        %283 = vset.pattern.permute.xlu0 0
        %284 = vperm.xlu0 %283, %v193
        %v285 = vpop.permute.xlu0 %284
        %286 = vset.pattern.permute.xlu0 0
        %287 = vperm.xlu0 %286, %v194
        %v288 = vpop.permute.xlu0 %287
        %289 = vset.pattern.permute.xlu0 0
        %290 = vperm.xlu0 %289, %v195
        %v291 = vpop.permute.xlu0 %290
        %292 = vset.pattern.permute.xlu0 0
        %293 = vperm.xlu0 %292, %v196
        %v294 = vpop.permute.xlu0 %293
        %295 = vset.pattern.permute.xlu0 0
        %296 = vperm.xlu0 %295, %v197
        %v297 = vpop.permute.xlu0 %296
        %298 = vset.pattern.permute.xlu0 0
        %299 = vperm.xlu0 %298, %v198
        %v300 = vpop.permute.xlu0 %299
        %301 = vset.pattern.permute.xlu0 0
        %302 = vperm.xlu0 %301, %v199
        %v303 = vpop.permute.xlu0 %302
        %304 = vset.pattern.permute.xlu0 0
        %305 = vperm.xlu0 %304, %v200
        %v306 = vpop.permute.xlu0 %305
        %307 = vset.pattern.permute.xlu0 0
        %308 = vperm.xlu0 %307, %v201
        %v309 = vpop.permute.xlu0 %308
        %310 = vset.pattern.permute.xlu0 0
        %311 = vperm.xlu0 %310, %v202
        %v312 = vpop.permute.xlu0 %311
        %313 = vset.pattern.permute.xlu0 0
        %314 = vperm.xlu0 %313, %v203
        %v315 = vpop.permute.xlu0 %314
        %316 = vset.pattern.permute.xlu0 0
        %317 = vperm.xlu0 %316, %v204
        %v318 = vpop.permute.xlu0 %317
        %319 = vset.pattern.permute.xlu0 0
        %320 = vperm.xlu0 %319, %v205
        %v321 = vpop.permute.xlu0 %320
        %322 = vset.pattern.permute.xlu0 0
        %323 = vperm.xlu0 %322, %v206
        %v324 = vpop.permute.xlu0 %323
        %325 = vset.pattern.permute.xlu0 0
        %326 = vperm.xlu0 %325, %v207
        %v327 = vpop.permute.xlu0 %326
        %328 = vset.pattern.permute.xlu0 0
        %329 = vperm.xlu0 %328, %v208
        %v330 = vpop.permute.xlu0 %329
        %331 = vset.pattern.permute.xlu0 0
        %332 = vperm.xlu0 %331, %v209
        %v333 = vpop.permute.xlu0 %332
        %334 = vset.pattern.permute.xlu0 0
        %335 = vperm.xlu0 %334, %v210
        %v336 = vpop.permute.xlu0 %335
        %337 = vset.pattern.permute.xlu0 0
        %338 = vperm.xlu0 %337, %v211
        %v339 = vpop.permute.xlu0 %338
        %340 = vset.pattern.permute.xlu0 0
        %341 = vperm.xlu0 %340, %v212
        %v342 = vpop.permute.xlu0 %341
        %343 = vset.pattern.permute.xlu0 0
        %344 = vperm.xlu0 %343, %v213
        %v345 = vpop.permute.xlu0 %344
        %346 = vset.pattern.permute.xlu0 0
        %347 = vperm.xlu0 %346, %v214
        %v348 = vpop.permute.xlu0 %347
        %349 = vset.pattern.permute.xlu0 0
        %350 = vperm.xlu0 %349, %v215
        %v351 = vpop.permute.xlu0 %350
        %352 = vset.pattern.permute.xlu0 0
        %353 = vperm.xlu0 %352, %v216
        %v354 = vpop.permute.xlu0 %353
        %355 = vset.pattern.permute.xlu0 0
        %356 = vperm.xlu0 %355, %v217
        %v357 = vpop.permute.xlu0 %356
        %358 = vset.pattern.permute.xlu0 0
        %359 = vperm.xlu0 %358, %v218
        %v360 = vpop.permute.xlu0 %359
        %361 = vset.pattern.permute.xlu0 0
        %362 = vperm.xlu0 %361, %v219
        %v363 = vpop.permute.xlu0 %362
        %364 = vset.pattern.permute.xlu0 0
        %365 = vperm.xlu0 %364, %v220
        %v366 = vpop.permute.xlu0 %365
        %vm367 = vcmp.eq.s32.totalorder %v222, %v225
        %vm368 = vcmp.eq.s32.totalorder %v222, %v228
        %vm369 = vcmp.eq.s32.totalorder %v222, %v231
        %vm370 = vcmp.eq.s32.totalorder %v222, %v234
        %vm371 = vcmp.eq.s32.totalorder %v222, %v237
        %vm372 = vcmp.eq.s32.totalorder %v222, %v240
        %vm373 = vcmp.eq.s32.totalorder %v222, %v243
        %vm374 = vcmp.eq.s32.totalorder %v222, %v246
        %vm375 = vcmp.eq.s32.totalorder %v222, %v249
        %vm376 = vcmp.eq.s32.totalorder %v222, %v252
        %vm377 = vcmp.eq.s32.totalorder %v222, %v255
        %vm378 = vcmp.eq.s32.totalorder %v222, %v258
        %vm379 = vcmp.eq.s32.totalorder %v222, %v261
        %vm380 = vcmp.eq.s32.totalorder %v222, %v264
        %vm381 = vcmp.eq.s32.totalorder %v222, %v267
        %vm382 = vcmp.eq.s32.totalorder %v222, %v270
        %vm383 = vcmp.eq.s32.totalorder %v222, %v273
        %vm384 = vcmp.eq.s32.totalorder %v222, %v276
        %vm385 = vcmp.eq.s32.totalorder %v222, %v279
        %vm386 = vcmp.eq.s32.totalorder %v222, %v282
        %vm387 = vcmp.eq.s32.totalorder %v222, %v285
        %vm388 = vcmp.eq.s32.totalorder %v222, %v288
        %vm389 = vcmp.eq.s32.totalorder %v222, %v291
        %vm390 = vcmp.eq.s32.totalorder %v222, %v294
        %vm391 = vcmp.eq.s32.totalorder %v222, %v297
        %vm392 = vcmp.eq.s32.totalorder %v222, %v300
        %vm393 = vcmp.eq.s32.totalorder %v222, %v303
        %vm394 = vcmp.eq.s32.totalorder %v222, %v306
        %vm395 = vcmp.eq.s32.totalorder %v222, %v309
        %vm396 = vcmp.eq.s32.totalorder %v222, %v312
        %vm397 = vcmp.eq.s32.totalorder %v222, %v315
        %vm398 = vcmp.eq.s32.totalorder %v222, %v318
        %vm399 = vcmp.eq.s32.totalorder %v222, %v321
        %vm400 = vcmp.eq.s32.totalorder %v222, %v324
        %vm401 = vcmp.eq.s32.totalorder %v222, %v327
        %vm402 = vcmp.eq.s32.totalorder %v222, %v330
        %vm403 = vcmp.eq.s32.totalorder %v222, %v333
        %vm404 = vcmp.eq.s32.totalorder %v222, %v336
        %vm405 = vcmp.eq.s32.totalorder %v222, %v339
        %vm406 = vcmp.eq.s32.totalorder %v222, %v342
        %vm407 = vcmp.eq.s32.totalorder %v222, %v345
        %vm408 = vcmp.eq.s32.totalorder %v222, %v348
        %vm409 = vcmp.eq.s32.totalorder %v222, %v351
        %vm410 = vcmp.eq.s32.totalorder %v222, %v354
        %vm411 = vcmp.eq.s32.totalorder %v222, %v357
        %vm412 = vcmp.eq.s32.totalorder %v222, %v360
        %vm413 = vcmp.eq.s32.totalorder %v222, %v363
        %vm414 = vcmp.eq.s32.totalorder %v222, %v366
        %v415 = vsel %vm367, 1, 0
        %v416 = vsel %vm368, 1, 0
        %v417 = vsel %vm369, 1, 0
        %v418 = vsel %vm370, 1, 0
        %v419 = vsel %vm371, 1, 0
        %v420 = vsel %vm372, 1, 0
        %v421 = vsel %vm373, 1, 0
        %v422 = vsel %vm374, 1, 0
        %v423 = vsel %vm375, 1, 0
        %v424 = vsel %vm376, 1, 0
        %v425 = vsel %vm377, 1, 0
        %v426 = vsel %vm378, 1, 0
        %v427 = vsel %vm379, 1, 0
        %v428 = vsel %vm380, 1, 0
        %v429 = vsel %vm381, 1, 0
        %v430 = vsel %vm382, 1, 0
        %v431 = vsel %vm383, 1, 0
        %v432 = vsel %vm384, 1, 0
        %v433 = vsel %vm385, 1, 0
        %v434 = vsel %vm386, 1, 0
        %v435 = vsel %vm387, 1, 0
        %v436 = vsel %vm388, 1, 0
        %v437 = vsel %vm389, 1, 0
        %v438 = vsel %vm390, 1, 0
        %v439 = vsel %vm391, 1, 0
        %v440 = vsel %vm392, 1, 0
        %v441 = vsel %vm393, 1, 0
        %v442 = vsel %vm394, 1, 0
        %v443 = vsel %vm395, 1, 0
        %v444 = vsel %vm396, 1, 0
        %v445 = vsel %vm397, 1, 0
        %v446 = vsel %vm398, 1, 0
        %v447 = vsel %vm399, 1, 0
        %v448 = vsel %vm400, 1, 0
        %v449 = vsel %vm401, 1, 0
        %v450 = vsel %vm402, 1, 0
        %v451 = vsel %vm403, 1, 0
        %v452 = vsel %vm404, 1, 0
        %v453 = vsel %vm405, 1, 0
        %v454 = vsel %vm406, 1, 0
        %v455 = vsel %vm407, 1, 0
        %v456 = vsel %vm408, 1, 0
        %v457 = vsel %vm409, 1, 0
        %v458 = vsel %vm410, 1, 0
        %v459 = vsel %vm411, 1, 0
        %v460 = vsel %vm412, 1, 0
        %v461 = vsel %vm413, 1, 0
        %v462 = vsel %vm414, 1, 0
        %v463 = vcvt.s32.f32 %v415
        %v464 = vcvt.s32.f32 %v416
        %v465 = vcvt.s32.f32 %v417
        %v466 = vcvt.s32.f32 %v418
        %v467 = vcvt.s32.f32 %v419
        %v468 = vcvt.s32.f32 %v420
        %v469 = vcvt.s32.f32 %v421
        %v470 = vcvt.s32.f32 %v422
        %v471 = vcvt.s32.f32 %v423
        %v472 = vcvt.s32.f32 %v424
        %v473 = vcvt.s32.f32 %v425
        %v474 = vcvt.s32.f32 %v426
        %v475 = vcvt.s32.f32 %v427
        %v476 = vcvt.s32.f32 %v428
        %v477 = vcvt.s32.f32 %v429
        %v478 = vcvt.s32.f32 %v430
        %v479 = vcvt.s32.f32 %v431
        %v480 = vcvt.s32.f32 %v432
        %v481 = vcvt.s32.f32 %v433
        %v482 = vcvt.s32.f32 %v434
        %v483 = vcvt.s32.f32 %v435
        %v484 = vcvt.s32.f32 %v436
        %v485 = vcvt.s32.f32 %v437
        %v486 = vcvt.s32.f32 %v438
        %v487 = vcvt.s32.f32 %v439
        %v488 = vcvt.s32.f32 %v440
        %v489 = vcvt.s32.f32 %v441
        %v490 = vcvt.s32.f32 %v442
        %v491 = vcvt.s32.f32 %v443
        %v492 = vcvt.s32.f32 %v444
        %v493 = vcvt.s32.f32 %v445
        %v494 = vcvt.s32.f32 %v446
        %v495 = vcvt.s32.f32 %v447
        %v496 = vcvt.s32.f32 %v448
        %v497 = vcvt.s32.f32 %v449
        %v498 = vcvt.s32.f32 %v450
        %v499 = vcvt.s32.f32 %v451
        %v500 = vcvt.s32.f32 %v452
        %v501 = vcvt.s32.f32 %v453
        %v502 = vcvt.s32.f32 %v454
        %v503 = vcvt.s32.f32 %v455
        %v504 = vcvt.s32.f32 %v456
        %v505 = vcvt.s32.f32 %v457
        %v506 = vcvt.s32.f32 %v458
        %v507 = vcvt.s32.f32 %v459
        %v508 = vcvt.s32.f32 %v460
        %v509 = vcvt.s32.f32 %v461
        %v510 = vcvt.s32.f32 %v462
        %v511 = vpack.c.bf16 %v464, %v463
        %v512 = vpack.c.bf16 %v466, %v465
        %v513 = vpack.c.bf16 %v468, %v467
        %v514 = vpack.c.bf16 %v470, %v469
        %v515 = vpack.c.bf16 %v472, %v471
        %v516 = vpack.c.bf16 %v474, %v473
        %v517 = vpack.c.bf16 %v476, %v475
        %v518 = vpack.c.bf16 %v478, %v477
        %v519 = vpack.c.bf16 %v480, %v479
        %v520 = vpack.c.bf16 %v482, %v481
        %v521 = vpack.c.bf16 %v484, %v483
        %v522 = vpack.c.bf16 %v486, %v485
        %v523 = vpack.c.bf16 %v488, %v487
        %v524 = vpack.c.bf16 %v490, %v489
        %v525 = vpack.c.bf16 %v492, %v491
        %v526 = vpack.c.bf16 %v494, %v493
        %v527 = vpack.c.bf16 %v496, %v495
        %v528 = vpack.c.bf16 %v498, %v497
        %v529 = vpack.c.bf16 %v500, %v499
        %v530 = vpack.c.bf16 %v502, %v501
        %v531 = vpack.c.bf16 %v504, %v503
        %v532 = vpack.c.bf16 %v506, %v505
        %v533 = vpack.c.bf16 %v508, %v507
        %v534 = vpack.c.bf16 %v510, %v509
        %v535 = vld [vmem:[%s1] sm:$0xff]
        %v536 = vld [vmem:[%s1 + $0x8] sm:$0xf]
        %v537 = vld [vmem:[%s1 + $0xc] sm:$0xff]
        %v538 = vld [vmem:[%s1 + $0x14] sm:$0xf]
        %v539 = vld [vmem:[%s1 + $0x18] sm:$0xff]
        %v540 = vld [vmem:[%s1 + $0x20] sm:$0xf]
        %v541 = vld [vmem:[%s1 + $0x24] sm:$0xff]
        %v542 = vld [vmem:[%s1 + $0x2c] sm:$0xf]
        %v543 = vld [vmem:[%s1 + $0x30] sm:$0xff]
        %v544 = vld [vmem:[%s1 + $0x38] sm:$0xf]
        %v545 = vld [vmem:[%s1 + $0x3c] sm:$0xff]
        %v546 = vld [vmem:[%s1 + $0x44] sm:$0xf]
        %v547 = vld [vmem:[%s1 + $0x48] sm:$0xff]
        %v548 = vld [vmem:[%s1 + $0x50] sm:$0xf]
        %v549 = vld [vmem:[%s1 + $0x54] sm:$0xff]
        %v550 = vld [vmem:[%s1 + $0x5c] sm:$0xf]
        %v551 = vld [vmem:[%s1 + $0x60] sm:$0xff]
        %v552 = vld [vmem:[%s1 + $0x68] sm:$0xf]
        %v553 = vld [vmem:[%s1 + $0x6c] sm:$0xff]
        %v554 = vld [vmem:[%s1 + $0x74] sm:$0xf]
        %v555 = vld [vmem:[%s1 + $0x78] sm:$0xff]
        %v556 = vld [vmem:[%s1 + $0x80] sm:$0xf]
        %v557 = vld [vmem:[%s1 + $0x84] sm:$0xff]
        %v558 = vld [vmem:[%s1 + $0x8c] sm:$0xf]
        %v559 = vld [vmem:[%s1 + $0x90] sm:$0xff]
        %v560 = vld [vmem:[%s1 + $0x98] sm:$0xf]
        %v561 = vld [vmem:[%s1 + $0x9c] sm:$0xff]
        %v562 = vld [vmem:[%s1 + $0xa4] sm:$0xf]
        %v563 = vld [vmem:[%s1 + $0xa8] sm:$0xff]
        %v564 = vld [vmem:[%s1 + $0xb0] sm:$0xf]
        %v565 = vld [vmem:[%s1 + $0xb4] sm:$0xff]
        %v566 = vld [vmem:[%s1 + $0xbc] sm:$0xf]
        %v599 = vunpack.c.l.b16 %v535
        %v600 = vunpack.c.h.b16 %v535
        %v601 = vunpack.c.l.b16 %v536
        %v602 = vunpack.c.l.b16 %v537
        %v603 = vunpack.c.h.b16 %v537
        %v604 = vunpack.c.l.b16 %v538
        %v605 = vunpack.c.l.b16 %v539
        %v606 = vunpack.c.h.b16 %v539
        %v607 = vunpack.c.l.b16 %v540
        %v608 = vunpack.c.l.b16 %v541
        %v609 = vunpack.c.h.b16 %v541
        %v610 = vunpack.c.l.b16 %v542
        %v611 = vunpack.c.l.b16 %v543
        %v612 = vunpack.c.h.b16 %v543
        %v613 = vunpack.c.l.b16 %v544
        %v614 = vunpack.c.l.b16 %v545
        %v615 = vunpack.c.h.b16 %v545
        %v616 = vunpack.c.l.b16 %v546
        %v617 = vunpack.c.l.b16 %v547
        %v618 = vunpack.c.h.b16 %v547
        %v619 = vunpack.c.l.b16 %v548
        %v620 = vunpack.c.l.b16 %v549
        %v621 = vunpack.c.h.b16 %v549
        %v622 = vunpack.c.l.b16 %v550
        %v623 = vunpack.c.l.b16 %v551
        %v624 = vunpack.c.h.b16 %v551
        %v625 = vunpack.c.l.b16 %v552
        %v626 = vunpack.c.l.b16 %v553
        %v627 = vunpack.c.h.b16 %v553
        %v628 = vunpack.c.l.b16 %v554
        %v629 = vunpack.c.l.b16 %v555
        %v630 = vunpack.c.h.b16 %v555
        %v631 = vunpack.c.l.b16 %v556
        %v632 = vunpack.c.l.b16 %v557
        %v633 = vunpack.c.h.b16 %v557
        %v634 = vunpack.c.l.b16 %v558
        %v635 = vunpack.c.l.b16 %v559
        %v636 = vunpack.c.h.b16 %v559
        %v637 = vunpack.c.l.b16 %v560
        %v638 = vunpack.c.l.b16 %v561
        %v639 = vunpack.c.h.b16 %v561
        %v640 = vunpack.c.l.b16 %v562
        %v641 = vunpack.c.l.b16 %v563
        %v642 = vunpack.c.h.b16 %v563
        %v643 = vunpack.c.l.b16 %v564
        %v644 = vunpack.c.l.b16 %v565
        %v645 = vunpack.c.h.b16 %v565
        %v646 = vunpack.c.l.b16 %v566
        %v647 = vpack.c.b16 %v602, %v599
        %v648 = vpack.c.b16 %v603, %v600
        %v649 = vpack.c.b16 %v604, %v601
        %v650 = vpack.c.b16 %v608, %v605
        %v651 = vpack.c.b16 %v609, %v606
        %v652 = vpack.c.b16 %v610, %v607
        %v653 = vpack.c.b16 %v614, %v611
        %v654 = vpack.c.b16 %v615, %v612
        %v655 = vpack.c.b16 %v616, %v613
        %v656 = vpack.c.b16 %v620, %v617
        %v657 = vpack.c.b16 %v621, %v618
        %v658 = vpack.c.b16 %v622, %v619
        %v659 = vpack.c.b16 %v626, %v623
        %v660 = vpack.c.b16 %v627, %v624
        %v661 = vpack.c.b16 %v628, %v625
        %v662 = vpack.c.b16 %v632, %v629
        %v663 = vpack.c.b16 %v633, %v630
        %v664 = vpack.c.b16 %v634, %v631
        %v665 = vpack.c.b16 %v638, %v635
        %v666 = vpack.c.b16 %v639, %v636
        %v667 = vpack.c.b16 %v640, %v637
        %v668 = vpack.c.b16 %v644, %v641
        %v669 = vpack.c.b16 %v645, %v642
        %v670 = vpack.c.b16 %v646, %v643
        %695 = vmatprep.subr.bf16.mxu0 %v669
        %696 = vmatpush1.bf16.msra.mxu0 %v668
        %697 = vmatprep.subr.bf16.mxu0 %v666
        %698 = vmatpush1.bf16.msra.mxu0 %v665
        %699 = vmatprep.subr.bf16.mxu0 %v663
        %700 = vmatpush1.bf16.msra.mxu0 %v662
        %701 = vmatprep.subr.bf16.mxu0 %v660
        %702 = vmatpush1.bf16.msra.mxu0 %v659
        %703 = vmatprep.subr.bf16.mxu0 %v657
        %704 = vmatpush1.bf16.msra.mxu0 %v656
        %705 = vmatprep.subr.bf16.mxu0 %v654
        %706 = vmatpush1.bf16.msra.mxu0 %v653
        %707 = vmatprep.subr.bf16.mxu0 %v651
        %708 = vmatpush1.bf16.msra.mxu0 %v650
        %709 = vmatprep.subr.bf16.mxu0 %v648
        %710 = vmatpush1.bf16.msra.mxu0 %v647
        %711 = vmatprep.subr.bf16.mxu0 0
        %712 = vmatpush2.bf16.msra.mxu0 0
        %713 = vmatprep.subr.bf16.mxu0 0
        %714 = vmatpush2.bf16.msra.mxu0 0
        %715 = vmatprep.subr.bf16.mxu0 0
        %716 = vmatpush2.bf16.msra.mxu0 0
        %717 = vmatprep.subr.bf16.mxu0 0
        %718 = vmatpush2.bf16.msra.mxu0 0
        %719 = vmatprep.subr.bf16.mxu0 0
        %720 = vmatpush2.bf16.msra.mxu0 0
        %721 = vmatprep.subr.bf16.mxu0 0
        %722 = vmatpush2.bf16.msra.mxu0 0
        %723 = vmatprep.subr.bf16.mxu0 0
        %724 = vmatpush2.bf16.msra.mxu0 0
        %725 = vmatprep.subr.bf16.mxu0 0
        %726 = vmatpush2.bf16.msra.mxu0 0
        %727 = vmatprep.mubr.bf16.mxu0 0
        %728 = vmatmul.mubr.bf16.gmra.mxu0 %v511
        %v729 = vpop.f32.mrf.mxu0
        %v730 = vadd.f32 0.0, %v729
        %v731 = vpop.f32.mrf.mxu0
        %v732 = vadd.f32 0.0, %v731
        %v733 = vpop.f32.mrf.mxu0
        %v734 = vadd.f32 0.0, %v733
        %v735 = vpop.f32.mrf.mxu0
        %v736 = vadd.f32 0.0, %v735
        %737 = vmatprep.mubr.bf16.mxu0 0
        %738 = vmatmul.mubr.bf16.gmra.mxu0 %v512
        %v739 = vpop.f32.mrf.mxu0
        %v740 = vadd.f32 0.0, %v739
        %v741 = vpop.f32.mrf.mxu0
        %v742 = vadd.f32 0.0, %v741
        %v743 = vpop.f32.mrf.mxu0
        %v744 = vadd.f32 0.0, %v743
        %v745 = vpop.f32.mrf.mxu0
        %v746 = vadd.f32 0.0, %v745
        %747 = vmatprep.mubr.bf16.mxu0 0
        %748 = vmatmul.mubr.bf16.gmra.mxu0 %v513
        %v749 = vpop.f32.mrf.mxu0
        %v750 = vadd.f32 0.0, %v749
        %v751 = vpop.f32.mrf.mxu0
        %v752 = vadd.f32 0.0, %v751
        %v753 = vpop.f32.mrf.mxu0
        %v754 = vadd.f32 0.0, %v753
        %v755 = vpop.f32.mrf.mxu0
        %v756 = vadd.f32 0.0, %v755
        %757 = vmatprep.mubr.bf16.mxu0 0
        %758 = vmatmul.mubr.bf16.gmra.mxu0 %v514
        %v759 = vpop.f32.mrf.mxu0
        %v760 = vadd.f32 0.0, %v759
        %v761 = vpop.f32.mrf.mxu0
        %v762 = vadd.f32 0.0, %v761
        %v763 = vpop.f32.mrf.mxu0
        %v764 = vadd.f32 0.0, %v763
        %v765 = vpop.f32.mrf.mxu0
        %v766 = vadd.f32 0.0, %v765
        %767 = vmatprep.mubr.bf16.mxu0 0
        %768 = vmatmul.mubr.bf16.gmra.mxu0 %v515
        %v769 = vpop.f32.mrf.mxu0
        %v770 = vadd.f32 0.0, %v769
        %v771 = vpop.f32.mrf.mxu0
        %v772 = vadd.f32 0.0, %v771
        %v773 = vpop.f32.mrf.mxu0
        %v774 = vadd.f32 0.0, %v773
        %v775 = vpop.f32.mrf.mxu0
        %v776 = vadd.f32 0.0, %v775
        %777 = vmatprep.mubr.bf16.mxu0 0
        %778 = vmatmul.mubr.bf16.gmra.mxu0 %v516
        %v779 = vpop.f32.mrf.mxu0
        %v780 = vadd.f32 0.0, %v779
        %v781 = vpop.f32.mrf.mxu0
        %v782 = vadd.f32 0.0, %v781
        %v783 = vpop.f32.mrf.mxu0
        %v784 = vadd.f32 0.0, %v783
        %v785 = vpop.f32.mrf.mxu0
        %v786 = vadd.f32 0.0, %v785
        %787 = vmatprep.mubr.bf16.mxu0 0
        %788 = vmatmul.mubr.bf16.gmra.mxu0 %v517
        %v789 = vpop.f32.mrf.mxu0
        %v790 = vadd.f32 0.0, %v789
        %v791 = vpop.f32.mrf.mxu0
        %v792 = vadd.f32 0.0, %v791
        %v793 = vpop.f32.mrf.mxu0
        %v794 = vadd.f32 0.0, %v793
        %v795 = vpop.f32.mrf.mxu0
        %v796 = vadd.f32 0.0, %v795
        %797 = vmatprep.mubr.bf16.mxu0 0
        %798 = vmatmul.mubr.bf16.gmra.mxu0 %v518
        %v799 = vpop.f32.mrf.mxu0
        %v800 = vadd.f32 0.0, %v799
        %v801 = vpop.f32.mrf.mxu0
        %v802 = vadd.f32 0.0, %v801
        %v803 = vpop.f32.mrf.mxu0
        %v804 = vadd.f32 0.0, %v803
        %v805 = vpop.f32.mrf.mxu0
        %v806 = vadd.f32 0.0, %v805
        %807 = vmatprep.mubr.bf16.mxu0 0
        %808 = vmatmul.mubr.bf16.gmra.mxu0 %v519
        %v809 = vpop.f32.mrf.mxu0
        %v810 = vadd.f32 0.0, %v809
        %v811 = vpop.f32.mrf.mxu0
        %v812 = vadd.f32 0.0, %v811
        %v813 = vpop.f32.mrf.mxu0
        %v814 = vadd.f32 0.0, %v813
        %v815 = vpop.f32.mrf.mxu0
        %v816 = vadd.f32 0.0, %v815
        %817 = vmatprep.mubr.bf16.mxu0 0
        %818 = vmatmul.mubr.bf16.gmra.mxu0 %v520
        %v819 = vpop.f32.mrf.mxu0
        %v820 = vadd.f32 0.0, %v819
        %v821 = vpop.f32.mrf.mxu0
        %v822 = vadd.f32 0.0, %v821
        %v823 = vpop.f32.mrf.mxu0
        %v824 = vadd.f32 0.0, %v823
        %v825 = vpop.f32.mrf.mxu0
        %v826 = vadd.f32 0.0, %v825
        %827 = vmatprep.mubr.bf16.mxu0 0
        %828 = vmatmul.mubr.bf16.gmra.mxu0 %v521
        %v829 = vpop.f32.mrf.mxu0
        %v830 = vadd.f32 0.0, %v829
        %v831 = vpop.f32.mrf.mxu0
        %v832 = vadd.f32 0.0, %v831
        %v833 = vpop.f32.mrf.mxu0
        %v834 = vadd.f32 0.0, %v833
        %v835 = vpop.f32.mrf.mxu0
        %v836 = vadd.f32 0.0, %v835
        %837 = vmatprep.mubr.bf16.mxu0 0
        %838 = vmatmul.mubr.bf16.gmra.mxu0 %v522
        %v839 = vpop.f32.mrf.mxu0
        %v840 = vadd.f32 0.0, %v839
        %v841 = vpop.f32.mrf.mxu0
        %v842 = vadd.f32 0.0, %v841
        %v843 = vpop.f32.mrf.mxu0
        %v844 = vadd.f32 0.0, %v843
        %v845 = vpop.f32.mrf.mxu0
        %v846 = vadd.f32 0.0, %v845
        %847 = vmatprep.mubr.bf16.mxu0 0
        %848 = vmatmul.mubr.bf16.gmra.mxu0 %v523
        %v849 = vpop.f32.mrf.mxu0
        %v850 = vadd.f32 0.0, %v849
        %v851 = vpop.f32.mrf.mxu0
        %v852 = vadd.f32 0.0, %v851
        %v853 = vpop.f32.mrf.mxu0
        %v854 = vadd.f32 0.0, %v853
        %v855 = vpop.f32.mrf.mxu0
        %v856 = vadd.f32 0.0, %v855
        %857 = vmatprep.mubr.bf16.mxu0 0
        %858 = vmatmul.mubr.bf16.gmra.mxu0 %v524
        %v859 = vpop.f32.mrf.mxu0
        %v860 = vadd.f32 0.0, %v859
        %v861 = vpop.f32.mrf.mxu0
        %v862 = vadd.f32 0.0, %v861
        %v863 = vpop.f32.mrf.mxu0
        %v864 = vadd.f32 0.0, %v863
        %v865 = vpop.f32.mrf.mxu0
        %v866 = vadd.f32 0.0, %v865
        %867 = vmatprep.mubr.bf16.mxu0 0
        %868 = vmatmul.mubr.bf16.gmra.mxu0 %v525
        %v869 = vpop.f32.mrf.mxu0
        %v870 = vadd.f32 0.0, %v869
        %v871 = vpop.f32.mrf.mxu0
        %v872 = vadd.f32 0.0, %v871
        %v873 = vpop.f32.mrf.mxu0
        %v874 = vadd.f32 0.0, %v873
        %v875 = vpop.f32.mrf.mxu0
        %v876 = vadd.f32 0.0, %v875
        %877 = vmatprep.mubr.bf16.mxu0 0
        %878 = vmatmul.mubr.bf16.gmra.mxu0 %v526
        %v879 = vpop.f32.mrf.mxu0
        %v880 = vadd.f32 0.0, %v879
        %v881 = vpop.f32.mrf.mxu0
        %v882 = vadd.f32 0.0, %v881
        %v883 = vpop.f32.mrf.mxu0
        %v884 = vadd.f32 0.0, %v883
        %v885 = vpop.f32.mrf.mxu0
        %v886 = vadd.f32 0.0, %v885
        %887 = vmatprep.mubr.bf16.mxu0 0
        %888 = vmatmul.mubr.bf16.gmra.mxu0 %v527
        %v889 = vpop.f32.mrf.mxu0
        %v890 = vadd.f32 0.0, %v889
        %v891 = vpop.f32.mrf.mxu0
        %v892 = vadd.f32 0.0, %v891
        %v893 = vpop.f32.mrf.mxu0
        %v894 = vadd.f32 0.0, %v893
        %v895 = vpop.f32.mrf.mxu0
        %v896 = vadd.f32 0.0, %v895
        %897 = vmatprep.mubr.bf16.mxu0 0
        %898 = vmatmul.mubr.bf16.gmra.mxu0 %v528
        %v899 = vpop.f32.mrf.mxu0
        %v900 = vadd.f32 0.0, %v899
        %v901 = vpop.f32.mrf.mxu0
        %v902 = vadd.f32 0.0, %v901
        %v903 = vpop.f32.mrf.mxu0
        %v904 = vadd.f32 0.0, %v903
        %v905 = vpop.f32.mrf.mxu0
        %v906 = vadd.f32 0.0, %v905
        %907 = vmatprep.mubr.bf16.mxu0 0
        %908 = vmatmul.mubr.bf16.gmra.mxu0 %v529
        %v909 = vpop.f32.mrf.mxu0
        %v910 = vadd.f32 0.0, %v909
        %v911 = vpop.f32.mrf.mxu0
        %v912 = vadd.f32 0.0, %v911
        %v913 = vpop.f32.mrf.mxu0
        %v914 = vadd.f32 0.0, %v913
        %v915 = vpop.f32.mrf.mxu0
        %v916 = vadd.f32 0.0, %v915
        %917 = vmatprep.mubr.bf16.mxu0 0
        %918 = vmatmul.mubr.bf16.gmra.mxu0 %v530
        %v919 = vpop.f32.mrf.mxu0
        %v920 = vadd.f32 0.0, %v919
        %v921 = vpop.f32.mrf.mxu0
        %v922 = vadd.f32 0.0, %v921
        %v923 = vpop.f32.mrf.mxu0
        %v924 = vadd.f32 0.0, %v923
        %v925 = vpop.f32.mrf.mxu0
        %v926 = vadd.f32 0.0, %v925
        %927 = vmatprep.mubr.bf16.mxu0 0
        %928 = vmatmul.mubr.bf16.gmra.mxu0 %v531
        %v929 = vpop.f32.mrf.mxu0
        %v930 = vadd.f32 0.0, %v929
        %v931 = vpop.f32.mrf.mxu0
        %v932 = vadd.f32 0.0, %v931
        %v933 = vpop.f32.mrf.mxu0
        %v934 = vadd.f32 0.0, %v933
        %v935 = vpop.f32.mrf.mxu0
        %v936 = vadd.f32 0.0, %v935
        %937 = vmatprep.mubr.bf16.mxu0 0
        %938 = vmatmul.mubr.bf16.gmra.mxu0 %v532
        %v939 = vpop.f32.mrf.mxu0
        %v940 = vadd.f32 0.0, %v939
        %v941 = vpop.f32.mrf.mxu0
        %v942 = vadd.f32 0.0, %v941
        %v943 = vpop.f32.mrf.mxu0
        %v944 = vadd.f32 0.0, %v943
        %v945 = vpop.f32.mrf.mxu0
        %v946 = vadd.f32 0.0, %v945
        %947 = vmatprep.mubr.bf16.mxu0 0
        %948 = vmatmul.mubr.bf16.gmra.mxu0 %v533
        %v949 = vpop.f32.mrf.mxu0
        %v950 = vadd.f32 0.0, %v949
        %v951 = vpop.f32.mrf.mxu0
        %v952 = vadd.f32 0.0, %v951
        %v953 = vpop.f32.mrf.mxu0
        %v954 = vadd.f32 0.0, %v953
        %v955 = vpop.f32.mrf.mxu0
        %v956 = vadd.f32 0.0, %v955
        %957 = vmatprep.mubr.bf16.mxu0 0
        %958 = vmatmul.mubr.bf16.gmra.mxu0 %v534
        %v959 = vpop.f32.mrf.mxu0
        %v960 = vadd.f32 0.0, %v959
        %v961 = vpop.f32.mrf.mxu0
        %v962 = vadd.f32 0.0, %v961
        %v963 = vpop.f32.mrf.mxu0
        %v964 = vadd.f32 0.0, %v963
        %v965 = vpop.f32.mrf.mxu0
        %v966 = vadd.f32 0.0, %v965
        %967 = vdwg.mxu0
        %968 = vmatprep.subr.bf16.mxu0 0
        %969 = vmatpush1.bf16.msra.mxu0 %v670
        %970 = vmatprep.subr.bf16.mxu0 0
        %971 = vmatpush1.bf16.msra.mxu0 %v667
        %972 = vmatprep.subr.bf16.mxu0 0
        %973 = vmatpush1.bf16.msra.mxu0 %v664
        %974 = vmatprep.subr.bf16.mxu0 0
        %975 = vmatpush1.bf16.msra.mxu0 %v661
        %976 = vmatprep.subr.bf16.mxu0 0
        %977 = vmatpush1.bf16.msra.mxu0 %v658
        %978 = vmatprep.subr.bf16.mxu0 0
        %979 = vmatpush1.bf16.msra.mxu0 %v655
        %980 = vmatprep.subr.bf16.mxu0 0
        %981 = vmatpush1.bf16.msra.mxu0 %v652
        %982 = vmatprep.subr.bf16.mxu0 0
        %983 = vmatpush1.bf16.msra.mxu0 %v649
        %984 = vmatprep.subr.bf16.mxu0 0
        %985 = vmatpush2.bf16.msra.mxu0 0
        %986 = vmatprep.subr.bf16.mxu0 0
        %987 = vmatpush2.bf16.msra.mxu0 0
        %988 = vmatprep.subr.bf16.mxu0 0
        %989 = vmatpush2.bf16.msra.mxu0 0
        %990 = vmatprep.subr.bf16.mxu0 0
        %991 = vmatpush2.bf16.msra.mxu0 0
        %992 = vmatprep.subr.bf16.mxu0 0
        %993 = vmatpush2.bf16.msra.mxu0 0
        %994 = vmatprep.subr.bf16.mxu0 0
        %995 = vmatpush2.bf16.msra.mxu0 0
        %996 = vmatprep.subr.bf16.mxu0 0
        %997 = vmatpush2.bf16.msra.mxu0 0
        %998 = vmatprep.subr.bf16.mxu0 0
        %999 = vmatpush2.bf16.msra.mxu0 0
        %1000 = vmatprep.mubr.bf16.mxu0 0
        %1001 = vmatmul.mubr.bf16.gmra.mxu0 %v511
        %v1002 = vpop.f32.mrf.mxu0
        %v1003 = vadd.f32 0.0, %v1002
        %v1004 = vpop.f32.mrf.mxu0
        %v1005 = vpop.f32.mrf.mxu0
        %v1006 = vadd.f32 0.0, %v1005
        %v1007 = vpop.f32.mrf.mxu0
        %1008 = vmatprep.mubr.bf16.mxu0 0
        %1009 = vmatmul.mubr.bf16.gmra.mxu0 %v512
        %v1010 = vpop.f32.mrf.mxu0
        %v1011 = vadd.f32 0.0, %v1010
        %v1012 = vpop.f32.mrf.mxu0
        %v1013 = vpop.f32.mrf.mxu0
        %v1014 = vadd.f32 0.0, %v1013
        %v1015 = vpop.f32.mrf.mxu0
        %1016 = vmatprep.mubr.bf16.mxu0 0
        %1017 = vmatmul.mubr.bf16.gmra.mxu0 %v513
        %v1018 = vpop.f32.mrf.mxu0
        %v1019 = vadd.f32 0.0, %v1018
        %v1020 = vpop.f32.mrf.mxu0
        %v1021 = vpop.f32.mrf.mxu0
        %v1022 = vadd.f32 0.0, %v1021
        %v1023 = vpop.f32.mrf.mxu0
        %1024 = vmatprep.mubr.bf16.mxu0 0
        %1025 = vmatmul.mubr.bf16.gmra.mxu0 %v514
        %v1026 = vpop.f32.mrf.mxu0
        %v1027 = vadd.f32 0.0, %v1026
        %v1028 = vpop.f32.mrf.mxu0
        %v1029 = vpop.f32.mrf.mxu0
        %v1030 = vadd.f32 0.0, %v1029
        %v1031 = vpop.f32.mrf.mxu0
        %1032 = vmatprep.mubr.bf16.mxu0 0
        %1033 = vmatmul.mubr.bf16.gmra.mxu0 %v515
        %v1034 = vpop.f32.mrf.mxu0
        %v1035 = vadd.f32 0.0, %v1034
        %v1036 = vpop.f32.mrf.mxu0
        %v1037 = vpop.f32.mrf.mxu0
        %v1038 = vadd.f32 0.0, %v1037
        %v1039 = vpop.f32.mrf.mxu0
        %1040 = vmatprep.mubr.bf16.mxu0 0
        %1041 = vmatmul.mubr.bf16.gmra.mxu0 %v516
        %v1042 = vpop.f32.mrf.mxu0
        %v1043 = vadd.f32 0.0, %v1042
        %v1044 = vpop.f32.mrf.mxu0
        %v1045 = vpop.f32.mrf.mxu0
        %v1046 = vadd.f32 0.0, %v1045
        %v1047 = vpop.f32.mrf.mxu0
        %1048 = vmatprep.mubr.bf16.mxu0 0
        %1049 = vmatmul.mubr.bf16.gmra.mxu0 %v517
        %v1050 = vpop.f32.mrf.mxu0
        %v1051 = vadd.f32 0.0, %v1050
        %v1052 = vpop.f32.mrf.mxu0
        %v1053 = vpop.f32.mrf.mxu0
        %v1054 = vadd.f32 0.0, %v1053
        %v1055 = vpop.f32.mrf.mxu0
        %1056 = vmatprep.mubr.bf16.mxu0 0
        %1057 = vmatmul.mubr.bf16.gmra.mxu0 %v518
        %v1058 = vpop.f32.mrf.mxu0
        %v1059 = vadd.f32 0.0, %v1058
        %v1060 = vpop.f32.mrf.mxu0
        %v1061 = vpop.f32.mrf.mxu0
        %v1062 = vadd.f32 0.0, %v1061
        %v1063 = vpop.f32.mrf.mxu0
        %1064 = vmatprep.mubr.bf16.mxu0 0
        %1065 = vmatmul.mubr.bf16.gmra.mxu0 %v519
        %v1066 = vpop.f32.mrf.mxu0
        %v1067 = vadd.f32 0.0, %v1066
        %v1068 = vpop.f32.mrf.mxu0
        %v1069 = vpop.f32.mrf.mxu0
        %v1070 = vadd.f32 0.0, %v1069
        %v1071 = vpop.f32.mrf.mxu0
        %1072 = vmatprep.mubr.bf16.mxu0 0
        %1073 = vmatmul.mubr.bf16.gmra.mxu0 %v520
        %v1074 = vpop.f32.mrf.mxu0
        %v1075 = vadd.f32 0.0, %v1074
        %v1076 = vpop.f32.mrf.mxu0
        %v1077 = vpop.f32.mrf.mxu0
        %v1078 = vadd.f32 0.0, %v1077
        %v1079 = vpop.f32.mrf.mxu0
        %1080 = vmatprep.mubr.bf16.mxu0 0
        %1081 = vmatmul.mubr.bf16.gmra.mxu0 %v521
        %v1082 = vpop.f32.mrf.mxu0
        %v1083 = vadd.f32 0.0, %v1082
        %v1084 = vpop.f32.mrf.mxu0
        %v1085 = vpop.f32.mrf.mxu0
        %v1086 = vadd.f32 0.0, %v1085
        %v1087 = vpop.f32.mrf.mxu0
        %1088 = vmatprep.mubr.bf16.mxu0 0
        %1089 = vmatmul.mubr.bf16.gmra.mxu0 %v522
        %v1090 = vpop.f32.mrf.mxu0
        %v1091 = vadd.f32 0.0, %v1090
        %v1092 = vpop.f32.mrf.mxu0
        %v1093 = vpop.f32.mrf.mxu0
        %v1094 = vadd.f32 0.0, %v1093
        %v1095 = vpop.f32.mrf.mxu0
        %1096 = vmatprep.mubr.bf16.mxu0 0
        %1097 = vmatmul.mubr.bf16.gmra.mxu0 %v523
        %v1098 = vpop.f32.mrf.mxu0
        %v1099 = vadd.f32 0.0, %v1098
        %v1100 = vpop.f32.mrf.mxu0
        %v1101 = vpop.f32.mrf.mxu0
        %v1102 = vadd.f32 0.0, %v1101
        %v1103 = vpop.f32.mrf.mxu0
        %1104 = vmatprep.mubr.bf16.mxu0 0
        %1105 = vmatmul.mubr.bf16.gmra.mxu0 %v524
        %v1106 = vpop.f32.mrf.mxu0
        %v1107 = vadd.f32 0.0, %v1106
        %v1108 = vpop.f32.mrf.mxu0
        %v1109 = vpop.f32.mrf.mxu0
        %v1110 = vadd.f32 0.0, %v1109
        %v1111 = vpop.f32.mrf.mxu0
        %1112 = vmatprep.mubr.bf16.mxu0 0
        %1113 = vmatmul.mubr.bf16.gmra.mxu0 %v525
        %v1114 = vpop.f32.mrf.mxu0
        %v1115 = vadd.f32 0.0, %v1114
        %v1116 = vpop.f32.mrf.mxu0
        %v1117 = vpop.f32.mrf.mxu0
        %v1118 = vadd.f32 0.0, %v1117
        %v1119 = vpop.f32.mrf.mxu0
        %1120 = vmatprep.mubr.bf16.mxu0 0
        %1121 = vmatmul.mubr.bf16.gmra.mxu0 %v526
        %v1122 = vpop.f32.mrf.mxu0
        %v1123 = vadd.f32 0.0, %v1122
        %v1124 = vpop.f32.mrf.mxu0
        %v1125 = vpop.f32.mrf.mxu0
        %v1126 = vadd.f32 0.0, %v1125
        %v1127 = vpop.f32.mrf.mxu0
        %1128 = vmatprep.mubr.bf16.mxu0 0
        %1129 = vmatmul.mubr.bf16.gmra.mxu0 %v527
        %v1130 = vpop.f32.mrf.mxu0
        %v1131 = vadd.f32 0.0, %v1130
        %v1132 = vpop.f32.mrf.mxu0
        %v1133 = vpop.f32.mrf.mxu0
        %v1134 = vadd.f32 0.0, %v1133
        %v1135 = vpop.f32.mrf.mxu0
        %1136 = vmatprep.mubr.bf16.mxu0 0
        %1137 = vmatmul.mubr.bf16.gmra.mxu0 %v528
        %v1138 = vpop.f32.mrf.mxu0
        %v1139 = vadd.f32 0.0, %v1138
        %v1140 = vpop.f32.mrf.mxu0
        %v1141 = vpop.f32.mrf.mxu0
        %v1142 = vadd.f32 0.0, %v1141
        %v1143 = vpop.f32.mrf.mxu0
        %1144 = vmatprep.mubr.bf16.mxu0 0
        %1145 = vmatmul.mubr.bf16.gmra.mxu0 %v529
        %v1146 = vpop.f32.mrf.mxu0
        %v1147 = vadd.f32 0.0, %v1146
        %v1148 = vpop.f32.mrf.mxu0
        %v1149 = vpop.f32.mrf.mxu0
        %v1150 = vadd.f32 0.0, %v1149
        %v1151 = vpop.f32.mrf.mxu0
        %1152 = vmatprep.mubr.bf16.mxu0 0
        %1153 = vmatmul.mubr.bf16.gmra.mxu0 %v530
        %v1154 = vpop.f32.mrf.mxu0
        %v1155 = vadd.f32 0.0, %v1154
        %v1156 = vpop.f32.mrf.mxu0
        %v1157 = vpop.f32.mrf.mxu0
        %v1158 = vadd.f32 0.0, %v1157
        %v1159 = vpop.f32.mrf.mxu0
        %1160 = vmatprep.mubr.bf16.mxu0 0
        %1161 = vmatmul.mubr.bf16.gmra.mxu0 %v531
        %v1162 = vpop.f32.mrf.mxu0
        %v1163 = vadd.f32 0.0, %v1162
        %v1164 = vpop.f32.mrf.mxu0
        %v1165 = vpop.f32.mrf.mxu0
        %v1166 = vadd.f32 0.0, %v1165
        %v1167 = vpop.f32.mrf.mxu0
        %1168 = vmatprep.mubr.bf16.mxu0 0
        %1169 = vmatmul.mubr.bf16.gmra.mxu0 %v532
        %v1170 = vpop.f32.mrf.mxu0
        %v1171 = vadd.f32 0.0, %v1170
        %v1172 = vpop.f32.mrf.mxu0
        %v1173 = vpop.f32.mrf.mxu0
        %v1174 = vadd.f32 0.0, %v1173
        %v1175 = vpop.f32.mrf.mxu0
        %1176 = vmatprep.mubr.bf16.mxu0 0
        %1177 = vmatmul.mubr.bf16.gmra.mxu0 %v533
        %v1178 = vpop.f32.mrf.mxu0
        %v1179 = vadd.f32 0.0, %v1178
        %v1180 = vpop.f32.mrf.mxu0
        %v1181 = vpop.f32.mrf.mxu0
        %v1182 = vadd.f32 0.0, %v1181
        %v1183 = vpop.f32.mrf.mxu0
        %1184 = vmatprep.mubr.bf16.mxu0 0
        %1185 = vmatmul.mubr.bf16.gmra.mxu0 %v534
        %v1186 = vpop.f32.mrf.mxu0
        %v1187 = vadd.f32 0.0, %v1186
        %v1188 = vpop.f32.mrf.mxu0
        %v1189 = vpop.f32.mrf.mxu0
        %v1190 = vadd.f32 0.0, %v1189
        %v1191 = vpop.f32.mrf.mxu0
        %1192 = vdwg.mxu0
        %1241 = vrot.lane.b32.xlu0 %v730, 64
        %v1242 = vpop.permute.xlu0 %1241
        %1243 = vrot.lane.b32.xlu0 %v734, 64
        %v1244 = vpop.permute.xlu0 %1243
        %1245 = vrot.lane.b32.xlu0 %v740, 64
        %v1246 = vpop.permute.xlu0 %1245
        %1247 = vrot.lane.b32.xlu0 %v744, 64
        %v1248 = vpop.permute.xlu0 %1247
        %1249 = vrot.lane.b32.xlu0 %v750, 64
        %v1250 = vpop.permute.xlu0 %1249
        %1251 = vrot.lane.b32.xlu0 %v754, 64
        %v1252 = vpop.permute.xlu0 %1251
        %1253 = vrot.lane.b32.xlu0 %v760, 64
        %v1254 = vpop.permute.xlu0 %1253
        %1255 = vrot.lane.b32.xlu0 %v764, 64
        %v1256 = vpop.permute.xlu0 %1255
        %1257 = vrot.lane.b32.xlu0 %v770, 64
        %v1258 = vpop.permute.xlu0 %1257
        %1259 = vrot.lane.b32.xlu0 %v774, 64
        %v1260 = vpop.permute.xlu0 %1259
        %1261 = vrot.lane.b32.xlu0 %v780, 64
        %v1262 = vpop.permute.xlu0 %1261
        %1263 = vrot.lane.b32.xlu0 %v784, 64
        %v1264 = vpop.permute.xlu0 %1263
        %1265 = vrot.lane.b32.xlu0 %v790, 64
        %v1266 = vpop.permute.xlu0 %1265
        %1267 = vrot.lane.b32.xlu0 %v794, 64
        %v1268 = vpop.permute.xlu0 %1267
        %1269 = vrot.lane.b32.xlu0 %v800, 64
        %v1270 = vpop.permute.xlu0 %1269
        %1271 = vrot.lane.b32.xlu0 %v804, 64
        %v1272 = vpop.permute.xlu0 %1271
        %1273 = vrot.lane.b32.xlu0 %v810, 64
        %v1274 = vpop.permute.xlu0 %1273
        %1275 = vrot.lane.b32.xlu0 %v814, 64
        %v1276 = vpop.permute.xlu0 %1275
        %1277 = vrot.lane.b32.xlu0 %v820, 64
        %v1278 = vpop.permute.xlu0 %1277
        %1279 = vrot.lane.b32.xlu0 %v824, 64
        %v1280 = vpop.permute.xlu0 %1279
        %1281 = vrot.lane.b32.xlu0 %v830, 64
        %v1282 = vpop.permute.xlu0 %1281
        %1283 = vrot.lane.b32.xlu0 %v834, 64
        %v1284 = vpop.permute.xlu0 %1283
        %1285 = vrot.lane.b32.xlu0 %v840, 64
        %v1286 = vpop.permute.xlu0 %1285
        %1287 = vrot.lane.b32.xlu0 %v844, 64
        %v1288 = vpop.permute.xlu0 %1287
        %1289 = vrot.lane.b32.xlu0 %v850, 64
        %v1290 = vpop.permute.xlu0 %1289
        %1291 = vrot.lane.b32.xlu0 %v854, 64
        %v1292 = vpop.permute.xlu0 %1291
        %1293 = vrot.lane.b32.xlu0 %v860, 64
        %v1294 = vpop.permute.xlu0 %1293
        %1295 = vrot.lane.b32.xlu0 %v864, 64
        %v1296 = vpop.permute.xlu0 %1295
        %1297 = vrot.lane.b32.xlu0 %v870, 64
        %v1298 = vpop.permute.xlu0 %1297
        %1299 = vrot.lane.b32.xlu0 %v874, 64
        %v1300 = vpop.permute.xlu0 %1299
        %1301 = vrot.lane.b32.xlu0 %v880, 64
        %v1302 = vpop.permute.xlu0 %1301
        %1303 = vrot.lane.b32.xlu0 %v884, 64
        %v1304 = vpop.permute.xlu0 %1303
        %1305 = vrot.lane.b32.xlu0 %v890, 64
        %v1306 = vpop.permute.xlu0 %1305
        %1307 = vrot.lane.b32.xlu0 %v894, 64
        %v1308 = vpop.permute.xlu0 %1307
        %1309 = vrot.lane.b32.xlu0 %v900, 64
        %v1310 = vpop.permute.xlu0 %1309
        %1311 = vrot.lane.b32.xlu0 %v904, 64
        %v1312 = vpop.permute.xlu0 %1311
        %1313 = vrot.lane.b32.xlu0 %v910, 64
        %v1314 = vpop.permute.xlu0 %1313
        %1315 = vrot.lane.b32.xlu0 %v914, 64
        %v1316 = vpop.permute.xlu0 %1315
        %1317 = vrot.lane.b32.xlu0 %v920, 64
        %v1318 = vpop.permute.xlu0 %1317
        %1319 = vrot.lane.b32.xlu0 %v924, 64
        %v1320 = vpop.permute.xlu0 %1319
        %1321 = vrot.lane.b32.xlu0 %v930, 64
        %v1322 = vpop.permute.xlu0 %1321
        %1323 = vrot.lane.b32.xlu0 %v934, 64
        %v1324 = vpop.permute.xlu0 %1323
        %1325 = vrot.lane.b32.xlu0 %v940, 64
        %v1326 = vpop.permute.xlu0 %1325
        %1327 = vrot.lane.b32.xlu0 %v944, 64
        %v1328 = vpop.permute.xlu0 %1327
        %1329 = vrot.lane.b32.xlu0 %v950, 64
        %v1330 = vpop.permute.xlu0 %1329
        %1331 = vrot.lane.b32.xlu0 %v954, 64
        %v1332 = vpop.permute.xlu0 %1331
        %1333 = vrot.lane.b32.xlu0 %v960, 64
        %v1334 = vpop.permute.xlu0 %1333
        %1335 = vrot.lane.b32.xlu0 %v964, 64
        %v1336 = vpop.permute.xlu0 %1335
        %v1385 = vrot.slane %v1242, 1
        %v1386 = vrot.slane %v1244, 1
        %v1387 = vrot.slane %v1246, 1
        %v1388 = vrot.slane %v1248, 1
        %v1389 = vrot.slane %v1250, 1
        %v1390 = vrot.slane %v1252, 1
        %v1391 = vrot.slane %v1254, 1
        %v1392 = vrot.slane %v1256, 1
        %v1393 = vrot.slane %v1258, 1
        %v1394 = vrot.slane %v1260, 1
        %v1395 = vrot.slane %v1262, 1
        %v1396 = vrot.slane %v1264, 1
        %v1397 = vrot.slane %v1266, 1
        %v1398 = vrot.slane %v1268, 1
        %v1399 = vrot.slane %v1270, 1
        %v1400 = vrot.slane %v1272, 1
        %v1401 = vrot.slane %v1274, 1
        %v1402 = vrot.slane %v1276, 1
        %v1403 = vrot.slane %v1278, 1
        %v1404 = vrot.slane %v1280, 1
        %v1405 = vrot.slane %v1282, 1
        %v1406 = vrot.slane %v1284, 1
        %v1407 = vrot.slane %v1286, 1
        %v1408 = vrot.slane %v1288, 1
        %v1409 = vrot.slane %v1290, 1
        %v1410 = vrot.slane %v1292, 1
        %v1411 = vrot.slane %v1294, 1
        %v1412 = vrot.slane %v1296, 1
        %v1413 = vrot.slane %v1298, 1
        %v1414 = vrot.slane %v1300, 1
        %v1415 = vrot.slane %v1302, 1
        %v1416 = vrot.slane %v1304, 1
        %v1417 = vrot.slane %v1306, 1
        %v1418 = vrot.slane %v1308, 1
        %v1419 = vrot.slane %v1310, 1
        %v1420 = vrot.slane %v1312, 1
        %v1421 = vrot.slane %v1314, 1
        %v1422 = vrot.slane %v1316, 1
        %v1423 = vrot.slane %v1318, 1
        %v1424 = vrot.slane %v1320, 1
        %v1425 = vrot.slane %v1322, 1
        %v1426 = vrot.slane %v1324, 1
        %v1427 = vrot.slane %v1326, 1
        %v1428 = vrot.slane %v1328, 1
        %v1429 = vrot.slane %v1330, 1
        %v1430 = vrot.slane %v1332, 1
        %v1431 = vrot.slane %v1334, 1
        %v1432 = vrot.slane %v1336, 1
        %v1433 = vlaneseq
        %v1434 = vshrl.u32 %v1433, 7
        %vm1435 = vcmp.lt.s32.totalorder %v1434, 7
        %v1436 = vsel %vm1435, %v1431, %v1432
        %v1437 = vsel %vm1435, %v1430, %v1431
        %v1438 = vsel %vm1435, %v1429, %v1430
        %v1439 = vsel %vm1435, %v1428, %v1429
        %v1440 = vsel %vm1435, %v1427, %v1428
        %v1441 = vsel %vm1435, %v1426, %v1427
        %v1442 = vsel %vm1435, %v1425, %v1426
        %v1443 = vsel %vm1435, %v1424, %v1425
        %v1444 = vsel %vm1435, %v1423, %v1424
        %v1445 = vsel %vm1435, %v1422, %v1423
        %v1446 = vsel %vm1435, %v1421, %v1422
        %v1447 = vsel %vm1435, %v1420, %v1421
        %v1448 = vsel %vm1435, %v1419, %v1420
        %v1449 = vsel %vm1435, %v1418, %v1419
        %v1450 = vsel %vm1435, %v1417, %v1418
        %v1451 = vsel %vm1435, %v1416, %v1417
        %v1452 = vsel %vm1435, %v1415, %v1416
        %v1453 = vsel %vm1435, %v1414, %v1415
        %v1454 = vsel %vm1435, %v1413, %v1414
        %v1455 = vsel %vm1435, %v1412, %v1413
        %v1456 = vsel %vm1435, %v1411, %v1412
        %v1457 = vsel %vm1435, %v1410, %v1411
        %v1458 = vsel %vm1435, %v1409, %v1410
        %v1459 = vsel %vm1435, %v1408, %v1409
        %v1460 = vsel %vm1435, %v1407, %v1408
        %v1461 = vsel %vm1435, %v1406, %v1407
        %v1462 = vsel %vm1435, %v1405, %v1406
        %v1463 = vsel %vm1435, %v1404, %v1405
        %v1464 = vsel %vm1435, %v1403, %v1404
        %v1465 = vsel %vm1435, %v1402, %v1403
        %v1466 = vsel %vm1435, %v1401, %v1402
        %v1467 = vsel %vm1435, %v1400, %v1401
        %v1468 = vsel %vm1435, %v1399, %v1400
        %v1469 = vsel %vm1435, %v1398, %v1399
        %v1470 = vsel %vm1435, %v1397, %v1398
        %v1471 = vsel %vm1435, %v1396, %v1397
        %v1472 = vsel %vm1435, %v1395, %v1396
        %v1473 = vsel %vm1435, %v1394, %v1395
        %v1474 = vsel %vm1435, %v1393, %v1394
        %v1475 = vsel %vm1435, %v1392, %v1393
        %v1476 = vsel %vm1435, %v1391, %v1392
        %v1477 = vsel %vm1435, %v1390, %v1391
        %v1478 = vsel %vm1435, %v1389, %v1390
        %v1479 = vsel %vm1435, %v1388, %v1389
        %v1480 = vsel %vm1435, %v1387, %v1388
        %v1481 = vsel %vm1435, %v1386, %v1387
        %v1482 = vsel %vm1435, %v1385, %v1386
        %v1483 = vsel %vm1435, %v1432, %v1385
        %v1484 = vadd.f32 %v730, %v1482
        %v1485 = vadd.f32 %v734, %v1481
        %v1486 = vadd.f32 %v740, %v1480
        %v1487 = vadd.f32 %v744, %v1479
        %v1488 = vadd.f32 %v750, %v1478
        %v1489 = vadd.f32 %v754, %v1477
        %v1490 = vadd.f32 %v760, %v1476
        %v1491 = vadd.f32 %v764, %v1475
        %v1492 = vadd.f32 %v770, %v1474
        %v1493 = vadd.f32 %v774, %v1473
        %v1494 = vadd.f32 %v780, %v1472
        %v1495 = vadd.f32 %v784, %v1471
        %v1496 = vadd.f32 %v790, %v1470
        %v1497 = vadd.f32 %v794, %v1469
        %v1498 = vadd.f32 %v800, %v1468
        %v1499 = vadd.f32 %v804, %v1467
        %v1500 = vadd.f32 %v810, %v1466
        %v1501 = vadd.f32 %v814, %v1465
        %v1502 = vadd.f32 %v820, %v1464
        %v1503 = vadd.f32 %v824, %v1463
        %v1504 = vadd.f32 %v830, %v1462
        %v1505 = vadd.f32 %v834, %v1461
        %v1506 = vadd.f32 %v840, %v1460
        %v1507 = vadd.f32 %v844, %v1459
        %v1508 = vadd.f32 %v850, %v1458
        %v1509 = vadd.f32 %v854, %v1457
        %v1510 = vadd.f32 %v860, %v1456
        %v1511 = vadd.f32 %v864, %v1455
        %v1512 = vadd.f32 %v870, %v1454
        %v1513 = vadd.f32 %v874, %v1453
        %v1514 = vadd.f32 %v880, %v1452
        %v1515 = vadd.f32 %v884, %v1451
        %v1516 = vadd.f32 %v890, %v1450
        %v1517 = vadd.f32 %v894, %v1449
        %v1518 = vadd.f32 %v900, %v1448
        %v1519 = vadd.f32 %v904, %v1447
        %v1520 = vadd.f32 %v910, %v1446
        %v1521 = vadd.f32 %v914, %v1445
        %v1522 = vadd.f32 %v920, %v1444
        %v1523 = vadd.f32 %v924, %v1443
        %v1524 = vadd.f32 %v930, %v1442
        %v1525 = vadd.f32 %v934, %v1441
        %v1526 = vadd.f32 %v940, %v1440
        %v1527 = vadd.f32 %v944, %v1439
        %v1528 = vadd.f32 %v950, %v1438
        %v1529 = vadd.f32 %v954, %v1437
        %v1530 = vadd.f32 %v960, %v1436
        %v1531 = vadd.f32 %v964, %v1483
        %v1532 = vrot.slane %v732, 2
        %v1533 = vrot.slane %v736, 2
        %v1534 = vrot.slane %v742, 2
        %v1535 = vrot.slane %v746, 2
        %v1536 = vrot.slane %v752, 2
        %v1537 = vrot.slane %v756, 2
        %v1538 = vrot.slane %v762, 2
        %v1539 = vrot.slane %v766, 2
        %v1540 = vrot.slane %v772, 2
        %v1541 = vrot.slane %v776, 2
        %v1542 = vrot.slane %v782, 2
        %v1543 = vrot.slane %v786, 2
        %v1544 = vrot.slane %v792, 2
        %v1545 = vrot.slane %v796, 2
        %v1546 = vrot.slane %v802, 2
        %v1547 = vrot.slane %v806, 2
        %v1548 = vrot.slane %v812, 2
        %v1549 = vrot.slane %v816, 2
        %v1550 = vrot.slane %v822, 2
        %v1551 = vrot.slane %v826, 2
        %v1552 = vrot.slane %v832, 2
        %v1553 = vrot.slane %v836, 2
        %v1554 = vrot.slane %v842, 2
        %v1555 = vrot.slane %v846, 2
        %v1556 = vrot.slane %v852, 2
        %v1557 = vrot.slane %v856, 2
        %v1558 = vrot.slane %v862, 2
        %v1559 = vrot.slane %v866, 2
        %v1560 = vrot.slane %v872, 2
        %v1561 = vrot.slane %v876, 2
        %v1562 = vrot.slane %v882, 2
        %v1563 = vrot.slane %v886, 2
        %v1564 = vrot.slane %v892, 2
        %v1565 = vrot.slane %v896, 2
        %v1566 = vrot.slane %v902, 2
        %v1567 = vrot.slane %v906, 2
        %v1568 = vrot.slane %v912, 2
        %v1569 = vrot.slane %v916, 2
        %v1570 = vrot.slane %v922, 2
        %v1571 = vrot.slane %v926, 2
        %v1572 = vrot.slane %v932, 2
        %v1573 = vrot.slane %v936, 2
        %v1574 = vrot.slane %v942, 2
        %v1575 = vrot.slane %v946, 2
        %v1576 = vrot.slane %v952, 2
        %v1577 = vrot.slane %v956, 2
        %v1578 = vrot.slane %v962, 2
        %v1579 = vrot.slane %v966, 2
        %vm1580 = vcmp.lt.s32.totalorder %v1434, 6
        %v1581 = vsel %vm1580, %v1578, %v1579
        %v1582 = vsel %vm1580, %v1577, %v1578
        %v1583 = vsel %vm1580, %v1576, %v1577
        %v1584 = vsel %vm1580, %v1575, %v1576
        %v1585 = vsel %vm1580, %v1574, %v1575
        %v1586 = vsel %vm1580, %v1573, %v1574
        %v1587 = vsel %vm1580, %v1572, %v1573
        %v1588 = vsel %vm1580, %v1571, %v1572
        %v1589 = vsel %vm1580, %v1570, %v1571
        %v1590 = vsel %vm1580, %v1569, %v1570
        %v1591 = vsel %vm1580, %v1568, %v1569
        %v1592 = vsel %vm1580, %v1567, %v1568
        %v1593 = vsel %vm1580, %v1566, %v1567
        %v1594 = vsel %vm1580, %v1565, %v1566
        %v1595 = vsel %vm1580, %v1564, %v1565
        %v1596 = vsel %vm1580, %v1563, %v1564
        %v1597 = vsel %vm1580, %v1562, %v1563
        %v1598 = vsel %vm1580, %v1561, %v1562
        %v1599 = vsel %vm1580, %v1560, %v1561
        %v1600 = vsel %vm1580, %v1559, %v1560
        %v1601 = vsel %vm1580, %v1558, %v1559
        %v1602 = vsel %vm1580, %v1557, %v1558
        %v1603 = vsel %vm1580, %v1556, %v1557
        %v1604 = vsel %vm1580, %v1555, %v1556
        %v1605 = vsel %vm1580, %v1554, %v1555
        %v1606 = vsel %vm1580, %v1553, %v1554
        %v1607 = vsel %vm1580, %v1552, %v1553
        %v1608 = vsel %vm1580, %v1551, %v1552
        %v1609 = vsel %vm1580, %v1550, %v1551
        %v1610 = vsel %vm1580, %v1549, %v1550
        %v1611 = vsel %vm1580, %v1548, %v1549
        %v1612 = vsel %vm1580, %v1547, %v1548
        %v1613 = vsel %vm1580, %v1546, %v1547
        %v1614 = vsel %vm1580, %v1545, %v1546
        %v1615 = vsel %vm1580, %v1544, %v1545
        %v1616 = vsel %vm1580, %v1543, %v1544
        %v1617 = vsel %vm1580, %v1542, %v1543
        %v1618 = vsel %vm1580, %v1541, %v1542
        %v1619 = vsel %vm1580, %v1540, %v1541
        %v1620 = vsel %vm1580, %v1539, %v1540
        %v1621 = vsel %vm1580, %v1538, %v1539
        %v1622 = vsel %vm1580, %v1537, %v1538
        %v1623 = vsel %vm1580, %v1536, %v1537
        %v1624 = vsel %vm1580, %v1535, %v1536
        %v1625 = vsel %vm1580, %v1534, %v1535
        %v1626 = vsel %vm1580, %v1533, %v1534
        %v1627 = vsel %vm1580, %v1532, %v1533
        %v1628 = vsel %vm1580, %v1579, %v1532
        %v1629 = vadd.f32 %v1484, %v1627
        %v1630 = vadd.f32 %v1485, %v1626
        %v1631 = vadd.f32 %v1486, %v1625
        %v1632 = vadd.f32 %v1487, %v1624
        %v1633 = vadd.f32 %v1488, %v1623
        %v1634 = vadd.f32 %v1489, %v1622
        %v1635 = vadd.f32 %v1490, %v1621
        %v1636 = vadd.f32 %v1491, %v1620
        %v1637 = vadd.f32 %v1492, %v1619
        %v1638 = vadd.f32 %v1493, %v1618
        %v1639 = vadd.f32 %v1494, %v1617
        %v1640 = vadd.f32 %v1495, %v1616
        %v1641 = vadd.f32 %v1496, %v1615
        %v1642 = vadd.f32 %v1497, %v1614
        %v1643 = vadd.f32 %v1498, %v1613
        %v1644 = vadd.f32 %v1499, %v1612
        %v1645 = vadd.f32 %v1500, %v1611
        %v1646 = vadd.f32 %v1501, %v1610
        %v1647 = vadd.f32 %v1502, %v1609
        %v1648 = vadd.f32 %v1503, %v1608
        %v1649 = vadd.f32 %v1504, %v1607
        %v1650 = vadd.f32 %v1505, %v1606
        %v1651 = vadd.f32 %v1506, %v1605
        %v1652 = vadd.f32 %v1507, %v1604
        %v1653 = vadd.f32 %v1508, %v1603
        %v1654 = vadd.f32 %v1509, %v1602
        %v1655 = vadd.f32 %v1510, %v1601
        %v1656 = vadd.f32 %v1511, %v1600
        %v1657 = vadd.f32 %v1512, %v1599
        %v1658 = vadd.f32 %v1513, %v1598
        %v1659 = vadd.f32 %v1514, %v1597
        %v1660 = vadd.f32 %v1515, %v1596
        %v1661 = vadd.f32 %v1516, %v1595
        %v1662 = vadd.f32 %v1517, %v1594
        %v1663 = vadd.f32 %v1518, %v1593
        %v1664 = vadd.f32 %v1519, %v1592
        %v1665 = vadd.f32 %v1520, %v1591
        %v1666 = vadd.f32 %v1521, %v1590
        %v1667 = vadd.f32 %v1522, %v1589
        %v1668 = vadd.f32 %v1523, %v1588
        %v1669 = vadd.f32 %v1524, %v1587
        %v1670 = vadd.f32 %v1525, %v1586
        %v1671 = vadd.f32 %v1526, %v1585
        %v1672 = vadd.f32 %v1527, %v1584
        %v1673 = vadd.f32 %v1528, %v1583
        %v1674 = vadd.f32 %v1529, %v1582
        %v1675 = vadd.f32 %v1530, %v1581
        %v1676 = vadd.f32 %v1531, %v1628
        %1725 = vrot.lane.b32.xlu0 %v732, 64
        %v1726 = vpop.permute.xlu0 %1725
        %1727 = vrot.lane.b32.xlu0 %v736, 64
        %v1728 = vpop.permute.xlu0 %1727
        %1729 = vrot.lane.b32.xlu0 %v742, 64
        %v1730 = vpop.permute.xlu0 %1729
        %1731 = vrot.lane.b32.xlu0 %v746, 64
        %v1732 = vpop.permute.xlu0 %1731
        %1733 = vrot.lane.b32.xlu0 %v752, 64
        %v1734 = vpop.permute.xlu0 %1733
        %1735 = vrot.lane.b32.xlu0 %v756, 64
        %v1736 = vpop.permute.xlu0 %1735
        %1737 = vrot.lane.b32.xlu0 %v762, 64
        %v1738 = vpop.permute.xlu0 %1737
        %1739 = vrot.lane.b32.xlu0 %v766, 64
        %v1740 = vpop.permute.xlu0 %1739
        %1741 = vrot.lane.b32.xlu0 %v772, 64
        %v1742 = vpop.permute.xlu0 %1741
        %1743 = vrot.lane.b32.xlu0 %v776, 64
        %v1744 = vpop.permute.xlu0 %1743
        %1745 = vrot.lane.b32.xlu0 %v782, 64
        %v1746 = vpop.permute.xlu0 %1745
        %1747 = vrot.lane.b32.xlu0 %v786, 64
        %v1748 = vpop.permute.xlu0 %1747
        %1749 = vrot.lane.b32.xlu0 %v792, 64
        %v1750 = vpop.permute.xlu0 %1749
        %1751 = vrot.lane.b32.xlu0 %v796, 64
        %v1752 = vpop.permute.xlu0 %1751
        %1753 = vrot.lane.b32.xlu0 %v802, 64
        %v1754 = vpop.permute.xlu0 %1753
        %1755 = vrot.lane.b32.xlu0 %v806, 64
        %v1756 = vpop.permute.xlu0 %1755
        %1757 = vrot.lane.b32.xlu0 %v812, 64
        %v1758 = vpop.permute.xlu0 %1757
        %1759 = vrot.lane.b32.xlu0 %v816, 64
        %v1760 = vpop.permute.xlu0 %1759
        %1761 = vrot.lane.b32.xlu0 %v822, 64
        %v1762 = vpop.permute.xlu0 %1761
        %1763 = vrot.lane.b32.xlu0 %v826, 64
        %v1764 = vpop.permute.xlu0 %1763
        %1765 = vrot.lane.b32.xlu0 %v832, 64
        %v1766 = vpop.permute.xlu0 %1765
        %1767 = vrot.lane.b32.xlu0 %v836, 64
        %v1768 = vpop.permute.xlu0 %1767
        %1769 = vrot.lane.b32.xlu0 %v842, 64
        %v1770 = vpop.permute.xlu0 %1769
        %1771 = vrot.lane.b32.xlu0 %v846, 64
        %v1772 = vpop.permute.xlu0 %1771
        %1773 = vrot.lane.b32.xlu0 %v852, 64
        %v1774 = vpop.permute.xlu0 %1773
        %1775 = vrot.lane.b32.xlu0 %v856, 64
        %v1776 = vpop.permute.xlu0 %1775
        %1777 = vrot.lane.b32.xlu0 %v862, 64
        %v1778 = vpop.permute.xlu0 %1777
        %1779 = vrot.lane.b32.xlu0 %v866, 64
        %v1780 = vpop.permute.xlu0 %1779
        %1781 = vrot.lane.b32.xlu0 %v872, 64
        %v1782 = vpop.permute.xlu0 %1781
        %1783 = vrot.lane.b32.xlu0 %v876, 64
        %v1784 = vpop.permute.xlu0 %1783
        %1785 = vrot.lane.b32.xlu0 %v882, 64
        %v1786 = vpop.permute.xlu0 %1785
        %1787 = vrot.lane.b32.xlu0 %v886, 64
        %v1788 = vpop.permute.xlu0 %1787
        %1789 = vrot.lane.b32.xlu0 %v892, 64
        %v1790 = vpop.permute.xlu0 %1789
        %1791 = vrot.lane.b32.xlu0 %v896, 64
        %v1792 = vpop.permute.xlu0 %1791
        %1793 = vrot.lane.b32.xlu0 %v902, 64
        %v1794 = vpop.permute.xlu0 %1793
        %1795 = vrot.lane.b32.xlu0 %v906, 64
        %v1796 = vpop.permute.xlu0 %1795
        %1797 = vrot.lane.b32.xlu0 %v912, 64
        %v1798 = vpop.permute.xlu0 %1797
        %1799 = vrot.lane.b32.xlu0 %v916, 64
        %v1800 = vpop.permute.xlu0 %1799
        %1801 = vrot.lane.b32.xlu0 %v922, 64
        %v1802 = vpop.permute.xlu0 %1801
        %1803 = vrot.lane.b32.xlu0 %v926, 64
        %v1804 = vpop.permute.xlu0 %1803
        %1805 = vrot.lane.b32.xlu0 %v932, 64
        %v1806 = vpop.permute.xlu0 %1805
        %1807 = vrot.lane.b32.xlu0 %v936, 64
        %v1808 = vpop.permute.xlu0 %1807
        %1809 = vrot.lane.b32.xlu0 %v942, 64
        %v1810 = vpop.permute.xlu0 %1809
        %1811 = vrot.lane.b32.xlu0 %v946, 64
        %v1812 = vpop.permute.xlu0 %1811
        %1813 = vrot.lane.b32.xlu0 %v952, 64
        %v1814 = vpop.permute.xlu0 %1813
        %1815 = vrot.lane.b32.xlu0 %v956, 64
        %v1816 = vpop.permute.xlu0 %1815
        %1817 = vrot.lane.b32.xlu0 %v962, 64
        %v1818 = vpop.permute.xlu0 %1817
        %1819 = vrot.lane.b32.xlu0 %v966, 64
        %v1820 = vpop.permute.xlu0 %1819
        %v1869 = vrot.slane %v1726, 3
        %v1870 = vrot.slane %v1728, 3
        %v1871 = vrot.slane %v1730, 3
        %v1872 = vrot.slane %v1732, 3
        %v1873 = vrot.slane %v1734, 3
        %v1874 = vrot.slane %v1736, 3
        %v1875 = vrot.slane %v1738, 3
        %v1876 = vrot.slane %v1740, 3
        %v1877 = vrot.slane %v1742, 3
        %v1878 = vrot.slane %v1744, 3
        %v1879 = vrot.slane %v1746, 3
        %v1880 = vrot.slane %v1748, 3
        %v1881 = vrot.slane %v1750, 3
        %v1882 = vrot.slane %v1752, 3
        %v1883 = vrot.slane %v1754, 3
        %v1884 = vrot.slane %v1756, 3
        %v1885 = vrot.slane %v1758, 3
        %v1886 = vrot.slane %v1760, 3
        %v1887 = vrot.slane %v1762, 3
        %v1888 = vrot.slane %v1764, 3
        %v1889 = vrot.slane %v1766, 3
        %v1890 = vrot.slane %v1768, 3
        %v1891 = vrot.slane %v1770, 3
        %v1892 = vrot.slane %v1772, 3
        %v1893 = vrot.slane %v1774, 3
        %v1894 = vrot.slane %v1776, 3
        %v1895 = vrot.slane %v1778, 3
        %v1896 = vrot.slane %v1780, 3
        %v1897 = vrot.slane %v1782, 3
        %v1898 = vrot.slane %v1784, 3
        %v1899 = vrot.slane %v1786, 3
        %v1900 = vrot.slane %v1788, 3
        %v1901 = vrot.slane %v1790, 3
        %v1902 = vrot.slane %v1792, 3
        %v1903 = vrot.slane %v1794, 3
        %v1904 = vrot.slane %v1796, 3
        %v1905 = vrot.slane %v1798, 3
        %v1906 = vrot.slane %v1800, 3
        %v1907 = vrot.slane %v1802, 3
        %v1908 = vrot.slane %v1804, 3
        %v1909 = vrot.slane %v1806, 3
        %v1910 = vrot.slane %v1808, 3
        %v1911 = vrot.slane %v1810, 3
        %v1912 = vrot.slane %v1812, 3
        %v1913 = vrot.slane %v1814, 3
        %v1914 = vrot.slane %v1816, 3
        %v1915 = vrot.slane %v1818, 3
        %v1916 = vrot.slane %v1820, 3
        %vm1917 = vcmp.lt.s32.totalorder %v1434, 5
        %v1918 = vsel %vm1917, %v1915, %v1916
        %v1919 = vsel %vm1917, %v1914, %v1915
        %v1920 = vsel %vm1917, %v1913, %v1914
        %v1921 = vsel %vm1917, %v1912, %v1913
        %v1922 = vsel %vm1917, %v1911, %v1912
        %v1923 = vsel %vm1917, %v1910, %v1911
        %v1924 = vsel %vm1917, %v1909, %v1910
        %v1925 = vsel %vm1917, %v1908, %v1909
        %v1926 = vsel %vm1917, %v1907, %v1908
        %v1927 = vsel %vm1917, %v1906, %v1907
        %v1928 = vsel %vm1917, %v1905, %v1906
        %v1929 = vsel %vm1917, %v1904, %v1905
        %v1930 = vsel %vm1917, %v1903, %v1904
        %v1931 = vsel %vm1917, %v1902, %v1903
        %v1932 = vsel %vm1917, %v1901, %v1902
        %v1933 = vsel %vm1917, %v1900, %v1901
        %v1934 = vsel %vm1917, %v1899, %v1900
        %v1935 = vsel %vm1917, %v1898, %v1899
        %v1936 = vsel %vm1917, %v1897, %v1898
        %v1937 = vsel %vm1917, %v1896, %v1897
        %v1938 = vsel %vm1917, %v1895, %v1896
        %v1939 = vsel %vm1917, %v1894, %v1895
        %v1940 = vsel %vm1917, %v1893, %v1894
        %v1941 = vsel %vm1917, %v1892, %v1893
        %v1942 = vsel %vm1917, %v1891, %v1892
        %v1943 = vsel %vm1917, %v1890, %v1891
        %v1944 = vsel %vm1917, %v1889, %v1890
        %v1945 = vsel %vm1917, %v1888, %v1889
        %v1946 = vsel %vm1917, %v1887, %v1888
        %v1947 = vsel %vm1917, %v1886, %v1887
        %v1948 = vsel %vm1917, %v1885, %v1886
        %v1949 = vsel %vm1917, %v1884, %v1885
        %v1950 = vsel %vm1917, %v1883, %v1884
        %v1951 = vsel %vm1917, %v1882, %v1883
        %v1952 = vsel %vm1917, %v1881, %v1882
        %v1953 = vsel %vm1917, %v1880, %v1881
        %v1954 = vsel %vm1917, %v1879, %v1880
        %v1955 = vsel %vm1917, %v1878, %v1879
        %v1956 = vsel %vm1917, %v1877, %v1878
        %v1957 = vsel %vm1917, %v1876, %v1877
        %v1958 = vsel %vm1917, %v1875, %v1876
        %v1959 = vsel %vm1917, %v1874, %v1875
        %v1960 = vsel %vm1917, %v1873, %v1874
        %v1961 = vsel %vm1917, %v1872, %v1873
        %v1962 = vsel %vm1917, %v1871, %v1872
        %v1963 = vsel %vm1917, %v1870, %v1871
        %v1964 = vsel %vm1917, %v1869, %v1870
        %v1965 = vsel %vm1917, %v1916, %v1869
        %v1966 = vadd.f32 %v1629, %v1964
        %v1967 = vadd.f32 %v1630, %v1963
        %v1968 = vadd.f32 %v1631, %v1962
        %v1969 = vadd.f32 %v1632, %v1961
        %v1970 = vadd.f32 %v1633, %v1960
        %v1971 = vadd.f32 %v1634, %v1959
        %v1972 = vadd.f32 %v1635, %v1958
        %v1973 = vadd.f32 %v1636, %v1957
        %v1974 = vadd.f32 %v1637, %v1956
        %v1975 = vadd.f32 %v1638, %v1955
        %v1976 = vadd.f32 %v1639, %v1954
        %v1977 = vadd.f32 %v1640, %v1953
        %v1978 = vadd.f32 %v1641, %v1952
        %v1979 = vadd.f32 %v1642, %v1951
        %v1980 = vadd.f32 %v1643, %v1950
        %v1981 = vadd.f32 %v1644, %v1949
        %v1982 = vadd.f32 %v1645, %v1948
        %v1983 = vadd.f32 %v1646, %v1947
        %v1984 = vadd.f32 %v1647, %v1946
        %v1985 = vadd.f32 %v1648, %v1945
        %v1986 = vadd.f32 %v1649, %v1944
        %v1987 = vadd.f32 %v1650, %v1943
        %v1988 = vadd.f32 %v1651, %v1942
        %v1989 = vadd.f32 %v1652, %v1941
        %v1990 = vadd.f32 %v1653, %v1940
        %v1991 = vadd.f32 %v1654, %v1939
        %v1992 = vadd.f32 %v1655, %v1938
        %v1993 = vadd.f32 %v1656, %v1937
        %v1994 = vadd.f32 %v1657, %v1936
        %v1995 = vadd.f32 %v1658, %v1935
        %v1996 = vadd.f32 %v1659, %v1934
        %v1997 = vadd.f32 %v1660, %v1933
        %v1998 = vadd.f32 %v1661, %v1932
        %v1999 = vadd.f32 %v1662, %v1931
        %v2000 = vadd.f32 %v1663, %v1930
        %v2001 = vadd.f32 %v1664, %v1929
        %v2002 = vadd.f32 %v1665, %v1928
        %v2003 = vadd.f32 %v1666, %v1927
        %v2004 = vadd.f32 %v1667, %v1926
        %v2005 = vadd.f32 %v1668, %v1925
        %v2006 = vadd.f32 %v1669, %v1924
        %v2007 = vadd.f32 %v1670, %v1923
        %v2008 = vadd.f32 %v1671, %v1922
        %v2009 = vadd.f32 %v1672, %v1921
        %v2010 = vadd.f32 %v1673, %v1920
        %v2011 = vadd.f32 %v1674, %v1919
        %v2012 = vadd.f32 %v1675, %v1918
        %v2013 = vadd.f32 %v1676, %v1965
        %v2014 = vrot.slane %v1003, 4
        %v2015 = vrot.slane %v1006, 4
        %v2016 = vrot.slane %v1011, 4
        %v2017 = vrot.slane %v1014, 4
        %v2018 = vrot.slane %v1019, 4
        %v2019 = vrot.slane %v1022, 4
        %v2020 = vrot.slane %v1027, 4
        %v2021 = vrot.slane %v1030, 4
        %v2022 = vrot.slane %v1035, 4
        %v2023 = vrot.slane %v1038, 4
        %v2024 = vrot.slane %v1043, 4
        %v2025 = vrot.slane %v1046, 4
        %v2026 = vrot.slane %v1051, 4
        %v2027 = vrot.slane %v1054, 4
        %v2028 = vrot.slane %v1059, 4
        %v2029 = vrot.slane %v1062, 4
        %v2030 = vrot.slane %v1067, 4
        %v2031 = vrot.slane %v1070, 4
        %v2032 = vrot.slane %v1075, 4
        %v2033 = vrot.slane %v1078, 4
        %v2034 = vrot.slane %v1083, 4
        %v2035 = vrot.slane %v1086, 4
        %v2036 = vrot.slane %v1091, 4
        %v2037 = vrot.slane %v1094, 4
        %v2038 = vrot.slane %v1099, 4
        %v2039 = vrot.slane %v1102, 4
        %v2040 = vrot.slane %v1107, 4
        %v2041 = vrot.slane %v1110, 4
        %v2042 = vrot.slane %v1115, 4
        %v2043 = vrot.slane %v1118, 4
        %v2044 = vrot.slane %v1123, 4
        %v2045 = vrot.slane %v1126, 4
        %v2046 = vrot.slane %v1131, 4
        %v2047 = vrot.slane %v1134, 4
        %v2048 = vrot.slane %v1139, 4
        %v2049 = vrot.slane %v1142, 4
        %v2050 = vrot.slane %v1147, 4
        %v2051 = vrot.slane %v1150, 4
        %v2052 = vrot.slane %v1155, 4
        %v2053 = vrot.slane %v1158, 4
        %v2054 = vrot.slane %v1163, 4
        %v2055 = vrot.slane %v1166, 4
        %v2056 = vrot.slane %v1171, 4
        %v2057 = vrot.slane %v1174, 4
        %v2058 = vrot.slane %v1179, 4
        %v2059 = vrot.slane %v1182, 4
        %v2060 = vrot.slane %v1187, 4
        %v2061 = vrot.slane %v1190, 4
        %vm2062 = vcmp.lt.s32.totalorder %v1434, 4
        %v2063 = vsel %vm2062, %v2060, %v2061
        %v2064 = vsel %vm2062, %v2059, %v2060
        %v2065 = vsel %vm2062, %v2058, %v2059
        %v2066 = vsel %vm2062, %v2057, %v2058
        %v2067 = vsel %vm2062, %v2056, %v2057
        %v2068 = vsel %vm2062, %v2055, %v2056
        %v2069 = vsel %vm2062, %v2054, %v2055
        %v2070 = vsel %vm2062, %v2053, %v2054
        %v2071 = vsel %vm2062, %v2052, %v2053
        %v2072 = vsel %vm2062, %v2051, %v2052
        %v2073 = vsel %vm2062, %v2050, %v2051
        %v2074 = vsel %vm2062, %v2049, %v2050
        %v2075 = vsel %vm2062, %v2048, %v2049
        %v2076 = vsel %vm2062, %v2047, %v2048
        %v2077 = vsel %vm2062, %v2046, %v2047
        %v2078 = vsel %vm2062, %v2045, %v2046
        %v2079 = vsel %vm2062, %v2044, %v2045
        %v2080 = vsel %vm2062, %v2043, %v2044
        %v2081 = vsel %vm2062, %v2042, %v2043
        %v2082 = vsel %vm2062, %v2041, %v2042
        %v2083 = vsel %vm2062, %v2040, %v2041
        %v2084 = vsel %vm2062, %v2039, %v2040
        %v2085 = vsel %vm2062, %v2038, %v2039
        %v2086 = vsel %vm2062, %v2037, %v2038
        %v2087 = vsel %vm2062, %v2036, %v2037
        %v2088 = vsel %vm2062, %v2035, %v2036
        %v2089 = vsel %vm2062, %v2034, %v2035
        %v2090 = vsel %vm2062, %v2033, %v2034
        %v2091 = vsel %vm2062, %v2032, %v2033
        %v2092 = vsel %vm2062, %v2031, %v2032
        %v2093 = vsel %vm2062, %v2030, %v2031
        %v2094 = vsel %vm2062, %v2029, %v2030
        %v2095 = vsel %vm2062, %v2028, %v2029
        %v2096 = vsel %vm2062, %v2027, %v2028
        %v2097 = vsel %vm2062, %v2026, %v2027
        %v2098 = vsel %vm2062, %v2025, %v2026
        %v2099 = vsel %vm2062, %v2024, %v2025
        %v2100 = vsel %vm2062, %v2023, %v2024
        %v2101 = vsel %vm2062, %v2022, %v2023
        %v2102 = vsel %vm2062, %v2021, %v2022
        %v2103 = vsel %vm2062, %v2020, %v2021
        %v2104 = vsel %vm2062, %v2019, %v2020
        %v2105 = vsel %vm2062, %v2018, %v2019
        %v2106 = vsel %vm2062, %v2017, %v2018
        %v2107 = vsel %vm2062, %v2016, %v2017
        %v2108 = vsel %vm2062, %v2015, %v2016
        %v2109 = vsel %vm2062, %v2014, %v2015
        %v2110 = vsel %vm2062, %v2061, %v2014
        %v2111 = vadd.f32 %v1966, %v2109
        %v2112 = vadd.f32 %v1967, %v2108
        %v2113 = vadd.f32 %v1968, %v2107
        %v2114 = vadd.f32 %v1969, %v2106
        %v2115 = vadd.f32 %v1970, %v2105
        %v2116 = vadd.f32 %v1971, %v2104
        %v2117 = vadd.f32 %v1972, %v2103
        %v2118 = vadd.f32 %v1973, %v2102
        %v2119 = vadd.f32 %v1974, %v2101
        %v2120 = vadd.f32 %v1975, %v2100
        %v2121 = vadd.f32 %v1976, %v2099
        %v2122 = vadd.f32 %v1977, %v2098
        %v2123 = vadd.f32 %v1978, %v2097
        %v2124 = vadd.f32 %v1979, %v2096
        %v2125 = vadd.f32 %v1980, %v2095
        %v2126 = vadd.f32 %v1981, %v2094
        %v2127 = vadd.f32 %v1982, %v2093
        %v2128 = vadd.f32 %v1983, %v2092
        %v2129 = vadd.f32 %v1984, %v2091
        %v2130 = vadd.f32 %v1985, %v2090
        %v2131 = vadd.f32 %v1986, %v2089
        %v2132 = vadd.f32 %v1987, %v2088
        %v2133 = vadd.f32 %v1988, %v2087
        %v2134 = vadd.f32 %v1989, %v2086
        %v2135 = vadd.f32 %v1990, %v2085
        %v2136 = vadd.f32 %v1991, %v2084
        %v2137 = vadd.f32 %v1992, %v2083
        %v2138 = vadd.f32 %v1993, %v2082
        %v2139 = vadd.f32 %v1994, %v2081
        %v2140 = vadd.f32 %v1995, %v2080
        %v2141 = vadd.f32 %v1996, %v2079
        %v2142 = vadd.f32 %v1997, %v2078
        %v2143 = vadd.f32 %v1998, %v2077
        %v2144 = vadd.f32 %v1999, %v2076
        %v2145 = vadd.f32 %v2000, %v2075
        %v2146 = vadd.f32 %v2001, %v2074
        %v2147 = vadd.f32 %v2002, %v2073
        %v2148 = vadd.f32 %v2003, %v2072
        %v2149 = vadd.f32 %v2004, %v2071
        %v2150 = vadd.f32 %v2005, %v2070
        %v2151 = vadd.f32 %v2006, %v2069
        %v2152 = vadd.f32 %v2007, %v2068
        %v2153 = vadd.f32 %v2008, %v2067
        %v2154 = vadd.f32 %v2009, %v2066
        %v2155 = vadd.f32 %v2010, %v2065
        %v2156 = vadd.f32 %v2011, %v2064
        %v2157 = vadd.f32 %v2012, %v2063
        %v2158 = vadd.f32 %v2013, %v2110
        %v2159 = vadd.s32 %v1434, 8
        %v2160 = vadd.s32 %v1434, 16
        %vm2161 = vcmp.lt.s32.totalorder %v1434, 16
        %vm2162 = vcmp.lt.s32.totalorder %v2159, 16
        %vm2163 = vcmp.lt.s32.totalorder %v2160, 16
        %v2164 = vsel %vm2161, %v2111, -inf
        %v2165 = vsel %vm2162, %v2112, -inf
        %v2166 = vsel %vm2163, %v2113, -inf
        %v2167 = vsel %vm2161, %v2114, -inf
        %v2168 = vsel %vm2162, %v2115, -inf
        %v2169 = vsel %vm2163, %v2116, -inf
        %v2170 = vsel %vm2161, %v2117, -inf
        %v2171 = vsel %vm2162, %v2118, -inf
        %v2172 = vsel %vm2163, %v2119, -inf
        %v2173 = vsel %vm2161, %v2120, -inf
        %v2174 = vsel %vm2162, %v2121, -inf
        %v2175 = vsel %vm2163, %v2122, -inf
        %v2176 = vsel %vm2161, %v2123, -inf
        %v2177 = vsel %vm2162, %v2124, -inf
        %v2178 = vsel %vm2163, %v2125, -inf
        %v2179 = vsel %vm2161, %v2126, -inf
        %v2180 = vsel %vm2162, %v2127, -inf
        %v2181 = vsel %vm2163, %v2128, -inf
        %v2182 = vsel %vm2161, %v2129, -inf
        %v2183 = vsel %vm2162, %v2130, -inf
        %v2184 = vsel %vm2163, %v2131, -inf
        %v2185 = vsel %vm2161, %v2132, -inf
        %v2186 = vsel %vm2162, %v2133, -inf
        %v2187 = vsel %vm2163, %v2134, -inf
        %v2188 = vsel %vm2161, %v2135, -inf
        %v2189 = vsel %vm2162, %v2136, -inf
        %v2190 = vsel %vm2163, %v2137, -inf
        %v2191 = vsel %vm2161, %v2138, -inf
        %v2192 = vsel %vm2162, %v2139, -inf
        %v2193 = vsel %vm2163, %v2140, -inf
        %v2194 = vsel %vm2161, %v2141, -inf
        %v2195 = vsel %vm2162, %v2142, -inf
        %v2196 = vsel %vm2163, %v2143, -inf
        %v2197 = vsel %vm2161, %v2144, -inf
        %v2198 = vsel %vm2162, %v2145, -inf
        %v2199 = vsel %vm2163, %v2146, -inf
        %v2200 = vsel %vm2161, %v2147, -inf
        %v2201 = vsel %vm2162, %v2148, -inf
        %v2202 = vsel %vm2163, %v2149, -inf
        %v2203 = vsel %vm2161, %v2150, -inf
        %v2204 = vsel %vm2162, %v2151, -inf
        %v2205 = vsel %vm2163, %v2152, -inf
        %v2206 = vsel %vm2161, %v2153, -inf
        %v2207 = vsel %vm2162, %v2154, -inf
        %v2208 = vsel %vm2163, %v2155, -inf
        %v2209 = vsel %vm2161, %v2156, -inf
        %v2210 = vsel %vm2162, %v2157, -inf
        %v2211 = vsel %vm2163, %v2158, -inf
        %vm2212 = vcmask 523264
        %v2213 = vsel %vm2212, %v2164, -inf
        %v2214 = vsel %vm2212, %v2165, -inf
        %v2215 = vmax.f32 %v2213, %v2214
        %v2216 = vsel %vm2212, %v2166, -inf
        %v2217 = vmax.f32 %v2215, %v2216
        %v2218 = vrot.slane %v2217, 4
        %v2219 = vmax.f32 %v2217, %v2218
        %v2220 = vrot.slane %v2219, 2
        %v2221 = vmax.f32 %v2219, %v2220
        %v2222 = vrot.slane %v2221, 1
        %v2223 = vmax.f32 %v2221, %v2222
        %v2224 = vsel %vm2212, %v2167, -inf
        %v2225 = vsel %vm2212, %v2168, -inf
        %v2226 = vmax.f32 %v2224, %v2225
        %v2227 = vsel %vm2212, %v2169, -inf
        %v2228 = vmax.f32 %v2226, %v2227
        %v2229 = vrot.slane %v2228, 4
        %v2230 = vmax.f32 %v2228, %v2229
        %v2231 = vrot.slane %v2230, 2
        %v2232 = vmax.f32 %v2230, %v2231
        %v2233 = vrot.slane %v2232, 1
        %v2234 = vmax.f32 %v2232, %v2233
        %v2235 = vsel %vm2212, %v2170, -inf
        %v2236 = vsel %vm2212, %v2171, -inf
        %v2237 = vmax.f32 %v2235, %v2236
        %v2238 = vsel %vm2212, %v2172, -inf
        %v2239 = vmax.f32 %v2237, %v2238
        %v2240 = vrot.slane %v2239, 4
        %v2241 = vmax.f32 %v2239, %v2240
        %v2242 = vrot.slane %v2241, 2
        %v2243 = vmax.f32 %v2241, %v2242
        %v2244 = vrot.slane %v2243, 1
        %v2245 = vmax.f32 %v2243, %v2244
        %v2246 = vsel %vm2212, %v2173, -inf
        %v2247 = vsel %vm2212, %v2174, -inf
        %v2248 = vmax.f32 %v2246, %v2247
        %v2249 = vsel %vm2212, %v2175, -inf
        %v2250 = vmax.f32 %v2248, %v2249
        %v2251 = vrot.slane %v2250, 4
        %v2252 = vmax.f32 %v2250, %v2251
        %v2253 = vrot.slane %v2252, 2
        %v2254 = vmax.f32 %v2252, %v2253
        %v2255 = vrot.slane %v2254, 1
        %v2256 = vmax.f32 %v2254, %v2255
        %v2257 = vsel %vm2212, %v2176, -inf
        %v2258 = vsel %vm2212, %v2177, -inf
        %v2259 = vmax.f32 %v2257, %v2258
        %v2260 = vsel %vm2212, %v2178, -inf
        %v2261 = vmax.f32 %v2259, %v2260
        %v2262 = vrot.slane %v2261, 4
        %v2263 = vmax.f32 %v2261, %v2262
        %v2264 = vrot.slane %v2263, 2
        %v2265 = vmax.f32 %v2263, %v2264
        %v2266 = vrot.slane %v2265, 1
        %v2267 = vmax.f32 %v2265, %v2266
        %v2268 = vsel %vm2212, %v2179, -inf
        %v2269 = vsel %vm2212, %v2180, -inf
        %v2270 = vmax.f32 %v2268, %v2269
        %v2271 = vsel %vm2212, %v2181, -inf
        %v2272 = vmax.f32 %v2270, %v2271
        %v2273 = vrot.slane %v2272, 4
        %v2274 = vmax.f32 %v2272, %v2273
        %v2275 = vrot.slane %v2274, 2
        %v2276 = vmax.f32 %v2274, %v2275
        %v2277 = vrot.slane %v2276, 1
        %v2278 = vmax.f32 %v2276, %v2277
        %v2279 = vsel %vm2212, %v2182, -inf
        %v2280 = vsel %vm2212, %v2183, -inf
        %v2281 = vmax.f32 %v2279, %v2280
        %v2282 = vsel %vm2212, %v2184, -inf
        %v2283 = vmax.f32 %v2281, %v2282
        %v2284 = vrot.slane %v2283, 4
        %v2285 = vmax.f32 %v2283, %v2284
        %v2286 = vrot.slane %v2285, 2
        %v2287 = vmax.f32 %v2285, %v2286
        %v2288 = vrot.slane %v2287, 1
        %v2289 = vmax.f32 %v2287, %v2288
        %v2290 = vsel %vm2212, %v2185, -inf
        %v2291 = vsel %vm2212, %v2186, -inf
        %v2292 = vmax.f32 %v2290, %v2291
        %v2293 = vsel %vm2212, %v2187, -inf
        %v2294 = vmax.f32 %v2292, %v2293
        %v2295 = vrot.slane %v2294, 4
        %v2296 = vmax.f32 %v2294, %v2295
        %v2297 = vrot.slane %v2296, 2
        %v2298 = vmax.f32 %v2296, %v2297
        %v2299 = vrot.slane %v2298, 1
        %v2300 = vmax.f32 %v2298, %v2299
        %v2301 = vsel %vm2212, %v2188, -inf
        %v2302 = vsel %vm2212, %v2189, -inf
        %v2303 = vmax.f32 %v2301, %v2302
        %v2304 = vsel %vm2212, %v2190, -inf
        %v2305 = vmax.f32 %v2303, %v2304
        %v2306 = vrot.slane %v2305, 4
        %v2307 = vmax.f32 %v2305, %v2306
        %v2308 = vrot.slane %v2307, 2
        %v2309 = vmax.f32 %v2307, %v2308
        %v2310 = vrot.slane %v2309, 1
        %v2311 = vmax.f32 %v2309, %v2310
        %v2312 = vsel %vm2212, %v2191, -inf
        %v2313 = vsel %vm2212, %v2192, -inf
        %v2314 = vmax.f32 %v2312, %v2313
        %v2315 = vsel %vm2212, %v2193, -inf
        %v2316 = vmax.f32 %v2314, %v2315
        %v2317 = vrot.slane %v2316, 4
        %v2318 = vmax.f32 %v2316, %v2317
        %v2319 = vrot.slane %v2318, 2
        %v2320 = vmax.f32 %v2318, %v2319
        %v2321 = vrot.slane %v2320, 1
        %v2322 = vmax.f32 %v2320, %v2321
        %v2323 = vsel %vm2212, %v2194, -inf
        %v2324 = vsel %vm2212, %v2195, -inf
        %v2325 = vmax.f32 %v2323, %v2324
        %v2326 = vsel %vm2212, %v2196, -inf
        %v2327 = vmax.f32 %v2325, %v2326
        %v2328 = vrot.slane %v2327, 4
        %v2329 = vmax.f32 %v2327, %v2328
        %v2330 = vrot.slane %v2329, 2
        %v2331 = vmax.f32 %v2329, %v2330
        %v2332 = vrot.slane %v2331, 1
        %v2333 = vmax.f32 %v2331, %v2332
        %v2334 = vsel %vm2212, %v2197, -inf
        %v2335 = vsel %vm2212, %v2198, -inf
        %v2336 = vmax.f32 %v2334, %v2335
        %v2337 = vsel %vm2212, %v2199, -inf
        %v2338 = vmax.f32 %v2336, %v2337
        %v2339 = vrot.slane %v2338, 4
        %v2340 = vmax.f32 %v2338, %v2339
        %v2341 = vrot.slane %v2340, 2
        %v2342 = vmax.f32 %v2340, %v2341
        %v2343 = vrot.slane %v2342, 1
        %v2344 = vmax.f32 %v2342, %v2343
        %v2345 = vsel %vm2212, %v2200, -inf
        %v2346 = vsel %vm2212, %v2201, -inf
        %v2347 = vmax.f32 %v2345, %v2346
        %v2348 = vsel %vm2212, %v2202, -inf
        %v2349 = vmax.f32 %v2347, %v2348
        %v2350 = vrot.slane %v2349, 4
        %v2351 = vmax.f32 %v2349, %v2350
        %v2352 = vrot.slane %v2351, 2
        %v2353 = vmax.f32 %v2351, %v2352
        %v2354 = vrot.slane %v2353, 1
        %v2355 = vmax.f32 %v2353, %v2354
        %v2356 = vsel %vm2212, %v2203, -inf
        %v2357 = vsel %vm2212, %v2204, -inf
        %v2358 = vmax.f32 %v2356, %v2357
        %v2359 = vsel %vm2212, %v2205, -inf
        %v2360 = vmax.f32 %v2358, %v2359
        %v2361 = vrot.slane %v2360, 4
        %v2362 = vmax.f32 %v2360, %v2361
        %v2363 = vrot.slane %v2362, 2
        %v2364 = vmax.f32 %v2362, %v2363
        %v2365 = vrot.slane %v2364, 1
        %v2366 = vmax.f32 %v2364, %v2365
        %v2367 = vsel %vm2212, %v2206, -inf
        %v2368 = vsel %vm2212, %v2207, -inf
        %v2369 = vmax.f32 %v2367, %v2368
        %v2370 = vsel %vm2212, %v2208, -inf
        %v2371 = vmax.f32 %v2369, %v2370
        %v2372 = vrot.slane %v2371, 4
        %v2373 = vmax.f32 %v2371, %v2372
        %v2374 = vrot.slane %v2373, 2
        %v2375 = vmax.f32 %v2373, %v2374
        %v2376 = vrot.slane %v2375, 1
        %v2377 = vmax.f32 %v2375, %v2376
        %v2378 = vsel %vm2212, %v2209, -inf
        %v2379 = vsel %vm2212, %v2210, -inf
        %v2380 = vmax.f32 %v2378, %v2379
        %v2381 = vsel %vm2212, %v2211, -inf
        %v2382 = vmax.f32 %v2380, %v2381
        %v2383 = vrot.slane %v2382, 4
        %v2384 = vmax.f32 %v2382, %v2383
        %v2385 = vrot.slane %v2384, 2
        %v2386 = vmax.f32 %v2384, %v2385
        %v2387 = vrot.slane %v2386, 1
        %v2388 = vmax.f32 %v2386, %v2387
        %v2389 = vld [vmem:[%s2] sm:$0x1]
        %v2391 = vlaneseq
        %v2392 = vshrl.u32 %v2391, 7
        %v2393 = vsub.s32 0, %v2392
        %v2394 = vrot.slane %v2389, %v2393
        %v2396 = vadd.f32 %v2223, %v2394
        %v2397 = vadd.f32 %v2234, %v2394
        %v2398 = vadd.f32 %v2245, %v2394
        %v2399 = vadd.f32 %v2256, %v2394
        %v2400 = vadd.f32 %v2267, %v2394
        %v2401 = vadd.f32 %v2278, %v2394
        %v2402 = vadd.f32 %v2289, %v2394
        %v2403 = vadd.f32 %v2300, %v2394
        %v2404 = vadd.f32 %v2311, %v2394
        %v2405 = vadd.f32 %v2322, %v2394
        %v2406 = vadd.f32 %v2333, %v2394
        %v2407 = vadd.f32 %v2344, %v2394
        %v2408 = vadd.f32 %v2355, %v2394
        %v2409 = vadd.f32 %v2366, %v2394
        %v2410 = vadd.f32 %v2377, %v2394
        %v2411 = vadd.f32 %v2388, %v2394
        %v2428 = vrot.slane %v2397, 7
        %vm2429 = vcmask 1041409
        %v2430 = vsel %vm2429, %v2428, %v2396
        %v2431 = vrot.slane %v2398, 6
        %vm2432 = vcmask 1042434
        %v2433 = vsel %vm2432, %v2431, %v2430
        %v2434 = vrot.slane %v2399, 5
        %vm2435 = vcmask 1043459
        %v2436 = vsel %vm2435, %v2434, %v2433
        %v2437 = vrot.slane %v2400, 4
        %vm2438 = vcmask 1044484
        %v2439 = vsel %vm2438, %v2437, %v2436
        %v2440 = vrot.slane %v2401, 3
        %vm2441 = vcmask 1045509
        %v2442 = vsel %vm2441, %v2440, %v2439
        %v2443 = vrot.slane %v2402, 2
        %vm2444 = vcmask 1046534
        %v2445 = vsel %vm2444, %v2443, %v2442
        %v2446 = vrot.slane %v2403, 1
        %vm2447 = vcmask 1047559
        %v2448 = vsel %vm2447, %v2446, %v2445
        %v2449 = vrot.slane %v2405, 7
        %v2450 = vsel %vm2429, %v2449, %v2404
        %v2451 = vrot.slane %v2406, 6
        %v2452 = vsel %vm2432, %v2451, %v2450
        %v2453 = vrot.slane %v2407, 5
        %v2454 = vsel %vm2435, %v2453, %v2452
        %v2455 = vrot.slane %v2408, 4
        %v2456 = vsel %vm2438, %v2455, %v2454
        %v2457 = vrot.slane %v2409, 3
        %v2458 = vsel %vm2441, %v2457, %v2456
        %v2459 = vrot.slane %v2410, 2
        %v2460 = vsel %vm2444, %v2459, %v2458
        %v2461 = vrot.slane %v2411, 1
        %v2462 = vsel %vm2447, %v2461, %v2460
        %2465 = vst.msk [vmem:[%s164] sm:$0xff] %vm2212, %v2448
        %2466 = vst.msk [vmem:[%s164 + $0x8] sm:$0xff] %vm2212, %v2462
        %s2467 = sand.u32 %s93, 1
        %s2468 = scalar_lea.sflag [#allocation3], %s2467
        %s2469 = sand.u32 %s93, 1
        %s2470 = smul.addr %s2469, 16
        %s2471 = scalar_lea.vmem [#allocation2], %s2470
        // Predicated region
        $region33: #{encode_forward.1} parent=31 // pred_check
          %p2472 = pneg %p103
        $region34: #{encode_forward.1} parent=31 // pred_check_branch
          %2474 = sbr.rel (%p2472) target = $region36
        $region35: #{encode_forward.1} parent=31 // pred_region
          %s2475 = smul.u32 2, %s17
          %s2477 = ssub.s32 256, 256
          %2478 = vsyncadd %s2468, %s2477
          %s2479 = smul.addr %s2475, 128
          %s2480 = scalar_lea.hbm %s3, %s2479
          %s2481 = sshll.u32 %s2471, 4
          %s2482 = int_to_ptr.vmem [resolvable:$true] %s2481
          %2487 = dma.vmem_to_hbm [thread:$0]  %s2482, 256, %s2480, %s2468, 128, 128, 8
        $region36: #{encode_forward.1} parent=31 // pred_fallthru
          _
      $region32: #{encode_forward.1} parent=5 // pred_fallthru
        _
      %p2488 = scmp.le.s32.totalorder 2, %s12
      // Predicated region
      $region37: #{encode_forward.1} parent=5 // pred_check
        %p2489 = pneg %p2488
      $region38: #{encode_forward.1} parent=5 // pred_check_branch
        %2491 = sbr.rel (%p2489) target = $region40
      $region39: #{encode_forward.1} parent=5 // pred_region
        %s2492 = ssub.s32 %s12, 2
        // Predicated region
        $region41: #{encode_forward.1} parent=39 // pred_check
          %p2493 = pneg %p109
        $region42: #{encode_forward.1} parent=39 // pred_check_branch
          %2495 = sbr.rel (%p2493) target = $region44
        $region43: #{encode_forward.1} parent=39 // pred_region
          %s2496 = sand.u32 %s94, 1
          %s2497 = scalar_lea.sflag [#allocation3], %s2496
          %s2498 = sand.u32 %s94, 1
          %s2499 = smul.addr %s2498, 16
          %s2500 = scalar_lea.vmem [#allocation2], %s2499
          %2501 = dma.done %s2497, 256
        $region44: #{encode_forward.1} parent=39 // pred_fallthru
          _
      $region40: #{encode_forward.1} parent=5 // pred_fallthru
        _
    $region6: #{encode_forward.1} parent=1 // loop_footer
      %s16 = sadd.s32 1, %s12
    $region7: #{encode_forward.1} parent=1 // loop_footer_branch
      %11 = sbr.rel target = $region3
    $region8: #{encode_forward.1} parent=1 // loop_exit
      _
    %2502 = vsyncpa [#allocation3], 1
    %s2503 = scalar_lea.sflag [#allocation3], 1
    %2504 = vsyncpa %s2503, 1

</llo_original>
